<compile_context>
chip_gen: v7x
topology: tpu7x:2x2x1
jax: 0.10.0
libtpu: 0.0.40
codegen_flags: <defaults>
</compile_context>

<pallas_src>
import functools

import jax
import jax.numpy as jnp
from jax.experimental import pallas as pl
from jax.experimental.pallas import tpu as pltpu


# ---------------------------------------------------------------------------
# In-kernel helpers (f32 values)
# ---------------------------------------------------------------------------
def _layer_norm(x, gamma, beta, eps=1e-5):
    # x: (M, D), gamma/beta: (1, D)
    mean = jnp.mean(x, axis=-1, keepdims=True)
    c = x - mean
    var = jnp.mean(c * c, axis=-1, keepdims=True)
    return c * jax.lax.rsqrt(var + eps) * gamma + beta


# ---------------------------------------------------------------------------
# Pallas kernel: one grid step == one (batch-block, layer) pair.
# The activation is carried in out_ref across the (innermost, "arbitrary")
# layer axis -- standard accumulator pattern; HBM writeback happens only when
# the batch block changes.
# ---------------------------------------------------------------------------
def encoder_kernel(x_ref, wqkv_ref, bqkv_ref, wo_ref, w1_ref, b1_ref, w2_ref,
                   bias_d_ref, out_ref, *, num_heads):
    l = pl.program_id(1)
    BB, T, D = x_ref.shape
    M = BB * T
    dh = D // num_heads

    # Initialize the carried activation at the first layer of each batch block.
    @pl.when(l == 0)
    def _():
        out_ref[...] = x_ref[...].astype(out_ref.dtype)

    x = out_ref[...].reshape(M, D).astype(jnp.float32)      # (M, D) f32 carry
    x_bf = x.astype(jnp.bfloat16)

    # packed per-layer vectors: rows = [bo, b2, ln1_g, ln1_b, ln2_g, ln2_b]
    bd = bias_d_ref[0]                                       # (6, D) f32
    bo, b2 = bd[0:1, :], bd[1:2, :]
    n1g, n1b = bd[2:3, :], bd[3:4, :]
    n2g, n2b = bd[4:5, :], bd[5:6, :]

    # --- self-attention ---
    # Fused QKV: one (M, D) @ (D, 3D) bf16 matmul, f32 accumulation.
    # 1/sqrt(dh) is already folded into the Q weight/bias at init time.
    qkv = jnp.dot(x_bf, wqkv_ref[0],
                  preferred_element_type=jnp.float32) + bqkv_ref[0]
    q3 = qkv[:, :D].reshape(BB, T, D).astype(jnp.bfloat16)
    k3 = qkv[:, D:2 * D].reshape(BB, T, D).astype(jnp.bfloat16)
    v3 = qkv[:, 2 * D:].reshape(BB, T, D).astype(jnp.bfloat16)

    heads = []
    for h in range(num_heads):                      # static unroll over heads
        sl = slice(h * dh, (h + 1) * dh)
        # bf16 operands, f32 accumulation on the MXU.
        s = jnp.einsum("bqd,bkd->bqk", q3[:, :, sl], k3[:, :, sl],
                       preferred_element_type=jnp.float32)
        s = s - jnp.max(s, axis=-1, keepdims=True)
        p = jnp.exp(s)
        p = p * pl.reciprocal(jnp.sum(p, axis=-1, keepdims=True), approx=True)
        heads.append(jnp.einsum("bqk,bkd->bqd",
                                p.astype(jnp.bfloat16), v3[:, :, sl],
                                preferred_element_type=jnp.float32))
    # fused output projection: one (M, D) @ (D, D) matmul over concatenated heads
    attn = jnp.concatenate(heads, axis=-1).reshape(M, D)
    attn = jnp.dot(attn.astype(jnp.bfloat16), wo_ref[0],
                   preferred_element_type=jnp.float32) + bo
    x = _layer_norm(x + attn, n1g, n1b)

    # --- feed-forward block ---
    h1 = jnp.dot(x.astype(jnp.bfloat16), w1_ref[0],
                 preferred_element_type=jnp.float32) + b1_ref[0]
    h1 = jnp.maximum(h1, 0.0)
    ff = jnp.dot(h1.astype(jnp.bfloat16), w2_ref[0],
                 preferred_element_type=jnp.float32) + b2
    x = _layer_norm(x + ff, n2g, n2b)

    out_ref[...] = x.reshape(BB, T, D).astype(out_ref.dtype)


# ---------------------------------------------------------------------------
# Wrapper
# ---------------------------------------------------------------------------
def _pick_batch_block(B, T):
    # Prefer >= 2 batch blocks (v7x megacore) while keeping M = BB*T bounded.
    best = 1
    for d in range(1, B + 1):
        if B % d == 0 and B // d >= 2 and d * T <= 1024:
            best = d
    return best if B >= 2 else B


def _vmem_limit_bytes():
    cap = 128 * 1024 * 1024
    try:
        info = pltpu.get_tpu_info()
        cap = int(getattr(info, "vmem_capacity_bytes", cap))
    except Exception:
        pass
    # ~48 MiB on v7x (64 MiB physical), 96 MiB on v5e/v6e (128 MiB physical).
    return int(min(cap * 3 // 4, 96 * 1024 * 1024))


def transformer_encoder(x, params, num_heads, *, batch_block=None):
    B, T, D = x.shape
    L = params["wqkv"].shape[0]
    BB = _pick_batch_block(B, T) if batch_block is None else batch_block
    assert B % BB == 0, "batch_block must divide batch"
    grid = (B // BB, L)

    weight_names = ("wqkv", "bqkv", "wo", "w1", "b1", "w2", "bias_d")
    weights = [params[n] for n in weight_names]

    def x_map(b, l):
        return (b, 0, 0)

    def w_map(b, l):
        return (l, 0, 0)

    in_specs = [pl.BlockSpec((BB, T, D), x_map)]
    in_specs += [pl.BlockSpec((1,) + w.shape[1:], w_map) for w in weights]
    out_specs = pl.BlockSpec((BB, T, D), x_map)

    kernel = functools.partial(encoder_kernel, num_heads=num_heads)
    return pl.pallas_call(
        kernel,
        out_shape=jax.ShapeDtypeStruct((B, T, D), jnp.float32),
        grid_spec=pltpu.PrefetchScalarGridSpec(
            num_scalar_prefetch=0,
            grid=grid,
            in_specs=in_specs,
            out_specs=out_specs),
        compiler_params=pltpu.CompilerParams(
            dimension_semantics=("parallel", "arbitrary"),
            vmem_limit_bytes=_vmem_limit_bytes()),
    )(x, *weights)


# ---------------------------------------------------------------------------
# Deterministic parameter init (PyTorch-convention shapes, transposed to the
# x @ W layout the kernel expects; matmul weights stored in bf16, 1/sqrt(dh)
# folded into the Q projection, small per-layer vectors packed).
# ---------------------------------------------------------------------------
def init_params(key, dim, num_heads, num_layers, ff=512):
    D, L, FF = dim, num_layers, ff
    dh = D // num_heads
    scale = 1.0 / (float(dh) ** 0.5)
    ks = jax.random.split(key, 8)

    def w(k, shape, fan_in):
        return jax.random.normal(k, shape, jnp.float32) / jnp.sqrt(float(fan_in))

    in_proj = w(ks[0], (L, 3 * D, D), D)           # PyTorch in_proj_weight layout
    in_b = w(ks[1], (L, 3 * D), D)
    # fold 1/sqrt(dh) into the Q columns of the packed QKV weight AND bias
    qkv_scale = jnp.concatenate(
        [jnp.full((D,), scale, jnp.float32), jnp.ones((2 * D,), jnp.float32)])
    wqkv = jnp.transpose(in_proj, (0, 2, 1)) * qkv_scale   # (L, D, 3D)
    bqkv = (in_b * qkv_scale)[:, None, :]                   # (L, 1, 3D)

    p = {}
    p["wqkv"] = wqkv.astype(jnp.bfloat16)
    p["bqkv"] = bqkv
    p["wo"] = jnp.transpose(w(ks[2], (L, D, D), D), (0, 2, 1)).astype(jnp.bfloat16)
    p["w1"] = jnp.transpose(w(ks[4], (L, FF, D), D), (0, 2, 1)).astype(jnp.bfloat16)
    p["b1"] = w(ks[5], (L, 1, FF), D)
    p["w2"] = jnp.transpose(w(ks[6], (L, D, FF), FF), (0, 2, 1)).astype(jnp.bfloat16)
    bo = w(ks[3], (L, D), D)
    b2 = w(ks[7], (L, D), FF)
    ones = jnp.ones((L, D), jnp.float32)
    zeros = jnp.zeros((L, D), jnp.float32)
    # packed small per-layer vectors: [bo, b2, ln1_g, ln1_b, ln2_g, ln2_b]
    p["bias_d"] = jnp.stack([bo, b2, ones, zeros, ones, zeros], axis=1)  # (L,6,D)
    return p


# ---------------------------------------------------------------------------
# Pure-JAX reference (PyTorch TransformerEncoderLayer semantics, post-norm,
# ReLU FFN, eval-mode dropout) consuming the same packed / bf16-quantized /
# scale-folded weights the kernel sees.
# ---------------------------------------------------------------------------
def reference(x, p, num_heads):
    B, T, D = x.shape
    L = p["wqkv"].shape[0]
    dh = D // num_heads
    hp = jax.lax.Precision.HIGHEST
    f32 = lambda a: a.astype(jnp.float32)

    def ln(z, g, b, eps=1e-5):
        m = z.mean(-1, keepdims=True)
        v = ((z - m) ** 2).mean(-1, keepdims=True)
        return (z - m) / jnp.sqrt(v + eps) * g + b

    for l in range(L):
        qkv = jnp.matmul(x, f32(p["wqkv"][l]), precision=hp) + p["bqkv"][l][0]
        q, k, v = qkv[..., :D], qkv[..., D:2 * D], qkv[..., 2 * D:]
        q = q.reshape(B, T, num_heads, dh).transpose(0, 2, 1, 3)
        k = k.reshape(B, T, num_heads, dh).transpose(0, 2, 1, 3)
        v = v.reshape(B, T, num_heads, dh).transpose(0, 2, 1, 3)
        # 1/sqrt(dh) already folded into q via the packed weights
        s = jnp.einsum("bhqd,bhkd->bhqk", q, k, precision=hp)
        a = jnp.einsum("bhqk,bhkd->bhqd", jax.nn.softmax(s, -1), v, precision=hp)
        a = a.transpose(0, 2, 1, 3).reshape(B, T, D)
        bd = p["bias_d"][l]
        bo, b2, n1g, n1b, n2g, n2b = (bd[i] for i in range(6))
        sa = jnp.matmul(a, f32(p["wo"][l]), precision=hp) + bo
        x = ln(x + sa, n1g, n1b)
        h = jax.nn.relu(jnp.matmul(x, f32(p["w1"][l]), precision=hp) + p["b1"][l][0])
        ffo = jnp.matmul(h, f32(p["w2"][l]), precision=hp) + b2
        x = ln(x + ffo, n2g, n2b)
    return x


if __name__ == "__main__":
    B, T, D, H, L = 2, 8, 32, 4, 2  # batch, seq, dim, heads, layers
    key = jax.random.PRNGKey(0)
    kx, kp = jax.random.split(key)
    x = jax.random.normal(kx, (B, T, D), jnp.float32)
    params = init_params(kp, D, H, L)

    out = jax.block_until_ready(transformer_encoder(x, params, H))

    assert out.shape == (B, T, D)
    if not bool(jnp.all(jnp.isfinite(out))):
        raise AssertionError("non-finite output")
    ref = reference(x, params, H)
    if not bool(jnp.allclose(out, ref, atol=2e-2, rtol=2e-2)):
        err = float(jnp.max(jnp.abs(out - ref)))
        raise AssertionError(f"kernel output does not match reference (max abs err {err})")
    print("KERNEL_OK")
</pallas_src>

<mosaic_0001>
module attributes {stable_mosaic.version = 11 : i64} {
  func.func @encoder_kernel(%arg0: i32, %arg1: i32, %arg2: memref<1x8x32xf32, #tpu.memory_space<vmem>>, %arg3: memref<1x32x96xbf16, #tpu.memory_space<vmem>>, %arg4: memref<1x1x96xf32, #tpu.memory_space<vmem>>, %arg5: memref<1x32x32xbf16, #tpu.memory_space<vmem>>, %arg6: memref<1x32x512xbf16, #tpu.memory_space<vmem>>, %arg7: memref<1x1x512xf32, #tpu.memory_space<vmem>>, %arg8: memref<1x512x32xbf16, #tpu.memory_space<vmem>>, %arg9: memref<1x6x32xf32, #tpu.memory_space<vmem>>, %arg10: memref<1x8x32xf32, #tpu.memory_space<vmem>>) attributes {dimension_semantics = [#tpu.dimension_semantics<parallel>, #tpu.dimension_semantics<arbitrary>], iteration_bounds = array<i64: 2, 2>, scalar_prefetch = 0 : i64, scratch_operands = 0 : i64, tpu.core_type = #tpu.core_type<tc>, window_params = [{transform_indices = @transform_0, window_bounds = array<i64: 1, 8, 32>}, {transform_indices = @transform_1, window_bounds = array<i64: 1, 32, 96>}, {transform_indices = @transform_2, window_bounds = array<i64: 1, 1, 96>}, {transform_indices = @transform_3, window_bounds = array<i64: 1, 32, 32>}, {transform_indices = @transform_4, window_bounds = array<i64: 1, 32, 512>}, {transform_indices = @transform_5, window_bounds = array<i64: 1, 1, 512>}, {transform_indices = @transform_6, window_bounds = array<i64: 1, 512, 32>}, {transform_indices = @transform_7, window_bounds = array<i64: 1, 6, 32>}, {transform_indices = @transform_8, window_bounds = array<i64: 1, 8, 32>}]} {
    %c0_i32 = arith.constant 0 : i32
    %0 = arith.cmpi eq, %arg1, %c0_i32 : i32
    %1 = arith.extui %0 : i1 to i32
    %c0_i32_0 = arith.constant 0 : i32
    %2 = arith.cmpi ne, %1, %c0_i32_0 : i32
    scf.if %2 {
      %c0_57 = arith.constant 0 : index
      %c0_58 = arith.constant 0 : index
      %c0_59 = arith.constant 0 : index
      %162 = vector.load %arg2[%c0_57, %c0_58, %c0_59] : memref<1x8x32xf32, #tpu.memory_space<vmem>>, vector<1x8x32xf32>
      %c0_60 = arith.constant 0 : index
      %c0_61 = arith.constant 0 : index
      %c0_62 = arith.constant 0 : index
      %163 = vector.load %arg10[%c0_60, %c0_61, %c0_62] : memref<1x8x32xf32, #tpu.memory_space<vmem>>, vector<1x8x32xf32>
      tpu.vector_store %arg10[%c0_60, %c0_61, %c0_62], %162 {strides = array<i32>} : memref<1x8x32xf32, #tpu.memory_space<vmem>>, vector<1x8x32xf32>,
    } else {
    }
    %c0 = arith.constant 0 : index
    %c0_1 = arith.constant 0 : index
    %c0_2 = arith.constant 0 : index
    %3 = vector.load %arg10[%c0, %c0_1, %c0_2] : memref<1x8x32xf32, #tpu.memory_space<vmem>>, vector<1x8x32xf32>
    %4 = vector.shape_cast %3 : vector<1x8x32xf32> to vector<8x32xf32>
    %5 = arith.truncf %4 : vector<8x32xf32> to vector<8x32xbf16>
    %c0_3 = arith.constant 0 : index
    %c0_4 = arith.constant 0 : index
    %c0_5 = arith.constant 0 : index
    %6 = vector.load %arg9[%c0_3, %c0_4, %c0_5] : memref<1x6x32xf32, #tpu.memory_space<vmem>>, vector<1x6x32xf32>
    %7 = vector.shape_cast %6 : vector<1x6x32xf32> to vector<6x32xf32>
    %8 = vector.extract_strided_slice %7 {offsets = [0, 0], sizes = [1, 32], strides = [1, 1]} : vector<6x32xf32> to vector<1x32xf32>
    %9 = vector.extract_strided_slice %7 {offsets = [1, 0], sizes = [1, 32], strides = [1, 1]} : vector<6x32xf32> to vector<1x32xf32>
    %10 = vector.extract_strided_slice %7 {offsets = [2, 0], sizes = [1, 32], strides = [1, 1]} : vector<6x32xf32> to vector<1x32xf32>
    %11 = vector.extract_strided_slice %7 {offsets = [3, 0], sizes = [1, 32], strides = [1, 1]} : vector<6x32xf32> to vector<1x32xf32>
    %12 = vector.extract_strided_slice %7 {offsets = [4, 0], sizes = [1, 32], strides = [1, 1]} : vector<6x32xf32> to vector<1x32xf32>
    %13 = vector.extract_strided_slice %7 {offsets = [5, 0], sizes = [1, 32], strides = [1, 1]} : vector<6x32xf32> to vector<1x32xf32>
    %c0_6 = arith.constant 0 : index
    %c0_7 = arith.constant 0 : index
    %c0_8 = arith.constant 0 : index
    %14 = vector.load %arg3[%c0_6, %c0_7, %c0_8] : memref<1x32x96xbf16, #tpu.memory_space<vmem>>, vector<1x32x96xbf16>
    %15 = vector.shape_cast %14 : vector<1x32x96xbf16> to vector<32x96xbf16>
    %cst = arith.constant dense<0.000000e+00> : vector<8x96xf32>
    %16 = tpu.matmul %5, %15, %cst {dimension_numbers = #tpu.dot_dimension_numbers<[1], [0], [0], [1], [0, 0, 1, 1], [], []>} : vector<8x32xbf16>, vector<32x96xbf16>, vector<8x96xf32> -> vector<8x96xf32>
    %c0_9 = arith.constant 0 : index
    %c0_10 = arith.constant 0 : index
    %c0_11 = arith.constant 0 : index
    %17 = vector.load %arg4[%c0_9, %c0_10, %c0_11] : memref<1x1x96xf32, #tpu.memory_space<vmem>>, vector<1x1x96xf32>
    %18 = vector.shape_cast %17 : vector<1x1x96xf32> to vector<1x96xf32>
    %19 = vector.broadcast %18 : vector<1x96xf32> to vector<8x96xf32>
    %20 = arith.addf %16, %19 : vector<8x96xf32>
    %21 = vector.extract_strided_slice %20 {offsets = [0, 0], sizes = [8, 32], strides = [1, 1]} : vector<8x96xf32> to vector<8x32xf32>
    %22 = vector.shape_cast %21 : vector<8x32xf32> to vector<1x8x32xf32>
    %23 = arith.truncf %22 : vector<1x8x32xf32> to vector<1x8x32xbf16>
    %24 = vector.extract_strided_slice %20 {offsets = [0, 32], sizes = [8, 32], strides = [1, 1]} : vector<8x96xf32> to vector<8x32xf32>
    %25 = vector.shape_cast %24 : vector<8x32xf32> to vector<1x8x32xf32>
    %26 = arith.truncf %25 : vector<1x8x32xf32> to vector<1x8x32xbf16>
    %27 = vector.extract_strided_slice %20 {offsets = [0, 64], sizes = [8, 32], strides = [1, 1]} : vector<8x96xf32> to vector<8x32xf32>
    %28 = vector.shape_cast %27 : vector<8x32xf32> to vector<1x8x32xf32>
    %29 = arith.truncf %28 : vector<1x8x32xf32> to vector<1x8x32xbf16>
    %30 = vector.extract_strided_slice %23 {offsets = [0, 0, 0], sizes = [1, 8, 8], strides = [1, 1, 1]} : vector<1x8x32xbf16> to vector<1x8x8xbf16>
    %31 = vector.extract_strided_slice %26 {offsets = [0, 0, 0], sizes = [1, 8, 8], strides = [1, 1, 1]} : vector<1x8x32xbf16> to vector<1x8x8xbf16>
    "tpu.trace_start"() <{level = 10 : i32, message = "bqd,bkd->bqk"}> : () -> ()
    %cst_12 = arith.constant dense<0.000000e+00> : vector<1x8x8xf32>
    %32 = tpu.matmul %30, %31, %cst_12 {dimension_numbers = #tpu.dot_dimension_numbers<[2], [2], [1], [1], [0, 0, 0, 1, 1, 1], [0], [0]>} : vector<1x8x8xbf16>, vector<1x8x8xbf16>, vector<1x8x8xf32> -> vector<1x8x8xf32>
    "tpu.trace_stop"() : () -> ()
    %cst_13 = arith.constant dense<0xFF800000> : vector<1x8xf32>
    %33 = vector.multi_reduction <maximumf>, %32, %cst_13 [2] : vector<1x8x8xf32> to vector<1x8xf32>
    %34 = vector.shape_cast %33 : vector<1x8xf32> to vector<1x8x1xf32>
    %35 = vector.broadcast %34 : vector<1x8x1xf32> to vector<1x8x8xf32>
    %36 = arith.subf %32, %35 : vector<1x8x8xf32>
    %37 = math.exp %36 : vector<1x8x8xf32>
    %cst_14 = arith.constant dense<0.000000e+00> : vector<1x8xf32>
    %38 = vector.multi_reduction <add>, %37, %cst_14 [2] : vector<1x8x8xf32> to vector<1x8xf32>
    %39 = vector.shape_cast %38 : vector<1x8xf32> to vector<1x8x1xf32>
    %40 = tpu.reciprocal %39 {approx = true} : vector<1x8x1xf32> -> vector<1x8x1xf32>
    %41 = vector.broadcast %40 : vector<1x8x1xf32> to vector<1x8x8xf32>
    %42 = arith.mulf %37, %41 : vector<1x8x8xf32>
    %43 = arith.truncf %42 : vector<1x8x8xf32> to vector<1x8x8xbf16>
    %44 = vector.extract_strided_slice %29 {offsets = [0, 0, 0], sizes = [1, 8, 8], strides = [1, 1, 1]} : vector<1x8x32xbf16> to vector<1x8x8xbf16>
    "tpu.trace_start"() <{level = 10 : i32, message = "bqk,bkd->bqd"}> : () -> ()
    %cst_15 = arith.constant dense<0.000000e+00> : vector<1x8x8xf32>
    %45 = tpu.matmul %43, %44, %cst_15 {dimension_numbers = #tpu.dot_dimension_numbers<[2], [1], [1], [2], [0, 0, 0, 1, 1, 2], [0], [0]>} : vector<1x8x8xbf16>, vector<1x8x8xbf16>, vector<1x8x8xf32> -> vector<1x8x8xf32>
    "tpu.trace_stop"() : () -> ()
    %46 = vector.extract_strided_slice %23 {offsets = [0, 0, 8], sizes = [1, 8, 8], strides = [1, 1, 1]} : vector<1x8x32xbf16> to vector<1x8x8xbf16>
    %47 = vector.extract_strided_slice %26 {offsets = [0, 0, 8], sizes = [1, 8, 8], strides = [1, 1, 1]} : vector<1x8x32xbf16> to vector<1x8x8xbf16>
    "tpu.trace_start"() <{level = 10 : i32, message = "bqd,bkd->bqk"}> : () -> ()
    %cst_16 = arith.constant dense<0.000000e+00> : vector<1x8x8xf32>
    %48 = tpu.matmul %46, %47, %cst_16 {dimension_numbers = #tpu.dot_dimension_numbers<[2], [2], [1], [1], [0, 0, 0, 1, 1, 1], [0], [0]>} : vector<1x8x8xbf16>, vector<1x8x8xbf16>, vector<1x8x8xf32> -> vector<1x8x8xf32>
    "tpu.trace_stop"() : () -> ()
    %cst_17 = arith.constant dense<0xFF800000> : vector<1x8xf32>
    %49 = vector.multi_reduction <maximumf>, %48, %cst_17 [2] : vector<1x8x8xf32> to vector<1x8xf32>
    %50 = vector.shape_cast %49 : vector<1x8xf32> to vector<1x8x1xf32>
    %51 = vector.broadcast %50 : vector<1x8x1xf32> to vector<1x8x8xf32>
    %52 = arith.subf %48, %51 : vector<1x8x8xf32>
    %53 = math.exp %52 : vector<1x8x8xf32>
    %cst_18 = arith.constant dense<0.000000e+00> : vector<1x8xf32>
    %54 = vector.multi_reduction <add>, %53, %cst_18 [2] : vector<1x8x8xf32> to vector<1x8xf32>
    %55 = vector.shape_cast %54 : vector<1x8xf32> to vector<1x8x1xf32>
    %56 = tpu.reciprocal %55 {approx = true} : vector<1x8x1xf32> -> vector<1x8x1xf32>
    %57 = vector.broadcast %56 : vector<1x8x1xf32> to vector<1x8x8xf32>
    %58 = arith.mulf %53, %57 : vector<1x8x8xf32>
    %59 = arith.truncf %58 : vector<1x8x8xf32> to vector<1x8x8xbf16>
    %60 = vector.extract_strided_slice %29 {offsets = [0, 0, 8], sizes = [1, 8, 8], strides = [1, 1, 1]} : vector<1x8x32xbf16> to vector<1x8x8xbf16>
    "tpu.trace_start"() <{level = 10 : i32, message = "bqk,bkd->bqd"}> : () -> ()
    %cst_19 = arith.constant dense<0.000000e+00> : vector<1x8x8xf32>
    %61 = tpu.matmul %59, %60, %cst_19 {dimension_numbers = #tpu.dot_dimension_numbers<[2], [1], [1], [2], [0, 0, 0, 1, 1, 2], [0], [0]>} : vector<1x8x8xbf16>, vector<1x8x8xbf16>, vector<1x8x8xf32> -> vector<1x8x8xf32>
    "tpu.trace_stop"() : () -> ()
    %62 = vector.extract_strided_slice %23 {offsets = [0, 0, 16], sizes = [1, 8, 8], strides = [1, 1, 1]} : vector<1x8x32xbf16> to vector<1x8x8xbf16>
    %63 = vector.extract_strided_slice %26 {offsets = [0, 0, 16], sizes = [1, 8, 8], strides = [1, 1, 1]} : vector<1x8x32xbf16> to vector<1x8x8xbf16>
    "tpu.trace_start"() <{level = 10 : i32, message = "bqd,bkd->bqk"}> : () -> ()
    %cst_20 = arith.constant dense<0.000000e+00> : vector<1x8x8xf32>
    %64 = tpu.matmul %62, %63, %cst_20 {dimension_numbers = #tpu.dot_dimension_numbers<[2], [2], [1], [1], [0, 0, 0, 1, 1, 1], [0], [0]>} : vector<1x8x8xbf16>, vector<1x8x8xbf16>, vector<1x8x8xf32> -> vector<1x8x8xf32>
    "tpu.trace_stop"() : () -> ()
    %cst_21 = arith.constant dense<0xFF800000> : vector<1x8xf32>
    %65 = vector.multi_reduction <maximumf>, %64, %cst_21 [2] : vector<1x8x8xf32> to vector<1x8xf32>
    %66 = vector.shape_cast %65 : vector<1x8xf32> to vector<1x8x1xf32>
    %67 = vector.broadcast %66 : vector<1x8x1xf32> to vector<1x8x8xf32>
    %68 = arith.subf %64, %67 : vector<1x8x8xf32>
    %69 = math.exp %68 : vector<1x8x8xf32>
    %cst_22 = arith.constant dense<0.000000e+00> : vector<1x8xf32>
    %70 = vector.multi_reduction <add>, %69, %cst_22 [2] : vector<1x8x8xf32> to vector<1x8xf32>
    %71 = vector.shape_cast %70 : vector<1x8xf32> to vector<1x8x1xf32>
    %72 = tpu.reciprocal %71 {approx = true} : vector<1x8x1xf32> -> vector<1x8x1xf32>
    %73 = vector.broadcast %72 : vector<1x8x1xf32> to vector<1x8x8xf32>
    %74 = arith.mulf %69, %73 : vector<1x8x8xf32>
    %75 = arith.truncf %74 : vector<1x8x8xf32> to vector<1x8x8xbf16>
    %76 = vector.extract_strided_slice %29 {offsets = [0, 0, 16], sizes = [1, 8, 8], strides = [1, 1, 1]} : vector<1x8x32xbf16> to vector<1x8x8xbf16>
    "tpu.trace_start"() <{level = 10 : i32, message = "bqk,bkd->bqd"}> : () -> ()
    %cst_23 = arith.constant dense<0.000000e+00> : vector<1x8x8xf32>
    %77 = tpu.matmul %75, %76, %cst_23 {dimension_numbers = #tpu.dot_dimension_numbers<[2], [1], [1], [2], [0, 0, 0, 1, 1, 2], [0], [0]>} : vector<1x8x8xbf16>, vector<1x8x8xbf16>, vector<1x8x8xf32> -> vector<1x8x8xf32>
    "tpu.trace_stop"() : () -> ()
    %78 = vector.extract_strided_slice %23 {offsets = [0, 0, 24], sizes = [1, 8, 8], strides = [1, 1, 1]} : vector<1x8x32xbf16> to vector<1x8x8xbf16>
    %79 = vector.extract_strided_slice %26 {offsets = [0, 0, 24], sizes = [1, 8, 8], strides = [1, 1, 1]} : vector<1x8x32xbf16> to vector<1x8x8xbf16>
    "tpu.trace_start"() <{level = 10 : i32, message = "bqd,bkd->bqk"}> : () -> ()
    %cst_24 = arith.constant dense<0.000000e+00> : vector<1x8x8xf32>
    %80 = tpu.matmul %78, %79, %cst_24 {dimension_numbers = #tpu.dot_dimension_numbers<[2], [2], [1], [1], [0, 0, 0, 1, 1, 1], [0], [0]>} : vector<1x8x8xbf16>, vector<1x8x8xbf16>, vector<1x8x8xf32> -> vector<1x8x8xf32>
    "tpu.trace_stop"() : () -> ()
    %cst_25 = arith.constant dense<0xFF800000> : vector<1x8xf32>
    %81 = vector.multi_reduction <maximumf>, %80, %cst_25 [2] : vector<1x8x8xf32> to vector<1x8xf32>
    %82 = vector.shape_cast %81 : vector<1x8xf32> to vector<1x8x1xf32>
    %83 = vector.broadcast %82 : vector<1x8x1xf32> to vector<1x8x8xf32>
    %84 = arith.subf %80, %83 : vector<1x8x8xf32>
    %85 = math.exp %84 : vector<1x8x8xf32>
    %cst_26 = arith.constant dense<0.000000e+00> : vector<1x8xf32>
    %86 = vector.multi_reduction <add>, %85, %cst_26 [2] : vector<1x8x8xf32> to vector<1x8xf32>
    %87 = vector.shape_cast %86 : vector<1x8xf32> to vector<1x8x1xf32>
    %88 = tpu.reciprocal %87 {approx = true} : vector<1x8x1xf32> -> vector<1x8x1xf32>
    %89 = vector.broadcast %88 : vector<1x8x1xf32> to vector<1x8x8xf32>
    %90 = arith.mulf %85, %89 : vector<1x8x8xf32>
    %91 = arith.truncf %90 : vector<1x8x8xf32> to vector<1x8x8xbf16>
    %92 = vector.extract_strided_slice %29 {offsets = [0, 0, 24], sizes = [1, 8, 8], strides = [1, 1, 1]} : vector<1x8x32xbf16> to vector<1x8x8xbf16>
    "tpu.trace_start"() <{level = 10 : i32, message = "bqk,bkd->bqd"}> : () -> ()
    %cst_27 = arith.constant dense<0.000000e+00> : vector<1x8x8xf32>
    %93 = tpu.matmul %91, %92, %cst_27 {dimension_numbers = #tpu.dot_dimension_numbers<[2], [1], [1], [2], [0, 0, 0, 1, 1, 2], [0], [0]>} : vector<1x8x8xbf16>, vector<1x8x8xbf16>, vector<1x8x8xf32> -> vector<1x8x8xf32>
    "tpu.trace_stop"() : () -> ()
    %94 = tpu.concatenate %45, %61, %77, %93 in 2 : vector<1x8x8xf32>, vector<1x8x8xf32>, vector<1x8x8xf32>, vector<1x8x8xf32> -> vector<1x8x32xf32>
    %95 = vector.shape_cast %94 : vector<1x8x32xf32> to vector<8x32xf32>
    %96 = arith.truncf %95 : vector<8x32xf32> to vector<8x32xbf16>
    %c0_28 = arith.constant 0 : index
    %c0_29 = arith.constant 0 : index
    %c0_30 = arith.constant 0 : index
    %97 = vector.load %arg5[%c0_28, %c0_29, %c0_30] : memref<1x32x32xbf16, #tpu.memory_space<vmem>>, vector<1x32x32xbf16>
    %98 = vector.shape_cast %97 : vector<1x32x32xbf16> to vector<32x32xbf16>
    %cst_31 = arith.constant dense<0.000000e+00> : vector<8x32xf32>
    %99 = tpu.matmul %96, %98, %cst_31 {dimension_numbers = #tpu.dot_dimension_numbers<[1], [0], [0], [1], [0, 0, 1, 1], [], []>} : vector<8x32xbf16>, vector<32x32xbf16>, vector<8x32xf32> -> vector<8x32xf32>
    %100 = vector.broadcast %8 : vector<1x32xf32> to vector<8x32xf32>
    %101 = arith.addf %99, %100 : vector<8x32xf32>
    %102 = arith.addf %4, %101 : vector<8x32xf32>
    %cst_32 = arith.constant dense<0.000000e+00> : vector<8xf32>
    %103 = vector.multi_reduction <add>, %102, %cst_32 [1] : vector<8x32xf32> to vector<8xf32>
    %104 = vector.shape_cast %103 : vector<8xf32> to vector<8x1xf32>
    %cst_33 = arith.constant 3.200000e+01 : f32
    %105 = vector.broadcast %cst_33 : f32 to vector<8x1xf32>
    %106 = arith.divf %104, %105 : vector<8x1xf32>
    %107 = vector.broadcast %106 : vector<8x1xf32> to vector<8x32xf32>
    %108 = arith.subf %102, %107 : vector<8x32xf32>
    %109 = arith.mulf %108, %108 : vector<8x32xf32>
    %cst_34 = arith.constant dense<0.000000e+00> : vector<8xf32>
    %110 = vector.multi_reduction <add>, %109, %cst_34 [1] : vector<8x32xf32> to vector<8xf32>
    %111 = vector.shape_cast %110 : vector<8xf32> to vector<8x1xf32>
    %cst_35 = arith.constant 3.200000e+01 : f32
    %112 = vector.broadcast %cst_35 : f32 to vector<8x1xf32>
    %113 = arith.divf %111, %112 : vector<8x1xf32>
    %cst_36 = arith.constant 9.99999974E-6 : f32
    %114 = vector.broadcast %cst_36 : f32 to vector<8x1xf32>
    %115 = arith.addf %113, %114 : vector<8x1xf32>
    %116 = math.rsqrt %115 : vector<8x1xf32>
    %117 = vector.broadcast %116 : vector<8x1xf32> to vector<8x32xf32>
    %118 = arith.mulf %108, %117 : vector<8x32xf32>
    %119 = vector.broadcast %10 : vector<1x32xf32> to vector<8x32xf32>
    %120 = arith.mulf %118, %119 : vector<8x32xf32>
    %121 = vector.broadcast %11 : vector<1x32xf32> to vector<8x32xf32>
    %122 = arith.addf %120, %121 : vector<8x32xf32>
    %123 = arith.truncf %122 : vector<8x32xf32> to vector<8x32xbf16>
    %c0_37 = arith.constant 0 : index
    %c0_38 = arith.constant 0 : index
    %c0_39 = arith.constant 0 : index
    %124 = vector.load %arg6[%c0_37, %c0_38, %c0_39] : memref<1x32x512xbf16, #tpu.memory_space<vmem>>, vector<1x32x512xbf16>
    %125 = vector.shape_cast %124 : vector<1x32x512xbf16> to vector<32x512xbf16>
    %cst_40 = arith.constant dense<0.000000e+00> : vector<8x512xf32>
    %126 = tpu.matmul %123, %125, %cst_40 {dimension_numbers = #tpu.dot_dimension_numbers<[1], [0], [0], [1], [0, 0, 1, 1], [], []>} : vector<8x32xbf16>, vector<32x512xbf16>, vector<8x512xf32> -> vector<8x512xf32>
    %c0_41 = arith.constant 0 : index
    %c0_42 = arith.constant 0 : index
    %c0_43 = arith.constant 0 : index
    %127 = vector.load %arg7[%c0_41, %c0_42, %c0_43] : memref<1x1x512xf32, #tpu.memory_space<vmem>>, vector<1x1x512xf32>
    %128 = vector.shape_cast %127 : vector<1x1x512xf32> to vector<1x512xf32>
    %129 = vector.broadcast %128 : vector<1x512xf32> to vector<8x512xf32>
    %130 = arith.addf %126, %129 : vector<8x512xf32>
    %cst_44 = arith.constant 0.000000e+00 : f32
    %131 = vector.broadcast %cst_44 : f32 to vector<8x512xf32>
    %132 = arith.maximumf %130, %131 : vector<8x512xf32>
    %133 = arith.truncf %132 : vector<8x512xf32> to vector<8x512xbf16>
    %c0_45 = arith.constant 0 : index
    %c0_46 = arith.constant 0 : index
    %c0_47 = arith.constant 0 : index
    %134 = vector.load %arg8[%c0_45, %c0_46, %c0_47] : memref<1x512x32xbf16, #tpu.memory_space<vmem>>, vector<1x512x32xbf16>
    %135 = vector.shape_cast %134 : vector<1x512x32xbf16> to vector<512x32xbf16>
    %cst_48 = arith.constant dense<0.000000e+00> : vector<8x32xf32>
    %136 = tpu.matmul %133, %135, %cst_48 {dimension_numbers = #tpu.dot_dimension_numbers<[1], [0], [0], [1], [0, 0, 1, 1], [], []>} : vector<8x512xbf16>, vector<512x32xbf16>, vector<8x32xf32> -> vector<8x32xf32>
    %137 = vector.broadcast %9 : vector<1x32xf32> to vector<8x32xf32>
    %138 = arith.addf %136, %137 : vector<8x32xf32>
    %139 = arith.addf %122, %138 : vector<8x32xf32>
    %cst_49 = arith.constant dense<0.000000e+00> : vector<8xf32>
    %140 = vector.multi_reduction <add>, %139, %cst_49 [1] : vector<8x32xf32> to vector<8xf32>
    %141 = vector.shape_cast %140 : vector<8xf32> to vector<8x1xf32>
    %cst_50 = arith.constant 3.200000e+01 : f32
    %142 = vector.broadcast %cst_50 : f32 to vector<8x1xf32>
    %143 = arith.divf %141, %142 : vector<8x1xf32>
    %144 = vector.broadcast %143 : vector<8x1xf32> to vector<8x32xf32>
    %145 = arith.subf %139, %144 : vector<8x32xf32>
    %146 = arith.mulf %145, %145 : vector<8x32xf32>
    %cst_51 = arith.constant dense<0.000000e+00> : vector<8xf32>
    %147 = vector.multi_reduction <add>, %146, %cst_51 [1] : vector<8x32xf32> to vector<8xf32>
    %148 = vector.shape_cast %147 : vector<8xf32> to vector<8x1xf32>
    %cst_52 = arith.constant 3.200000e+01 : f32
    %149 = vector.broadcast %cst_52 : f32 to vector<8x1xf32>
    %150 = arith.divf %148, %149 : vector<8x1xf32>
    %cst_53 = arith.constant 9.99999974E-6 : f32
    %151 = vector.broadcast %cst_53 : f32 to vector<8x1xf32>
    %152 = arith.addf %150, %151 : vector<8x1xf32>
    %153 = math.rsqrt %152 : vector<8x1xf32>
    %154 = vector.broadcast %153 : vector<8x1xf32> to vector<8x32xf32>
    %155 = arith.mulf %145, %154 : vector<8x32xf32>
    %156 = vector.broadcast %12 : vector<1x32xf32> to vector<8x32xf32>
    %157 = arith.mulf %155, %156 : vector<8x32xf32>
    %158 = vector.broadcast %13 : vector<1x32xf32> to vector<8x32xf32>
    %159 = arith.addf %157, %158 : vector<8x32xf32>
    %160 = vector.shape_cast %159 : vector<8x32xf32> to vector<1x8x32xf32>
    %c0_54 = arith.constant 0 : index
    %c0_55 = arith.constant 0 : index
    %c0_56 = arith.constant 0 : index
    %161 = vector.load %arg10[%c0_54, %c0_55, %c0_56] : memref<1x8x32xf32, #tpu.memory_space<vmem>>, vector<1x8x32xf32>
    tpu.vector_store %arg10[%c0_54, %c0_55, %c0_56], %160 {strides = array<i32>} : memref<1x8x32xf32, #tpu.memory_space<vmem>>, vector<1x8x32xf32>,
    return
  }
  func.func @transform_0(%arg0: i32, %arg1: i32) -> (i32, i32, i32) {
    %c0_i32 = arith.constant 0 : i32
    %c0_i32_0 = arith.constant 0 : i32
    %c0_i32_1 = arith.constant 0 : i32
    return %arg0, %c0_i32, %c0_i32_0 : i32, i32, i32
  }
  func.func @transform_1(%arg0: i32, %arg1: i32) -> (i32, i32, i32) {
    %c0_i32 = arith.constant 0 : i32
    %c0_i32_0 = arith.constant 0 : i32
    %c0_i32_1 = arith.constant 0 : i32
    return %arg1, %c0_i32, %c0_i32_0 : i32, i32, i32
  }
  func.func @transform_2(%arg0: i32, %arg1: i32) -> (i32, i32, i32) {
    %c0_i32 = arith.constant 0 : i32
    %c0_i32_0 = arith.constant 0 : i32
    %c0_i32_1 = arith.constant 0 : i32
    return %arg1, %c0_i32, %c0_i32_0 : i32, i32, i32
  }
  func.func @transform_3(%arg0: i32, %arg1: i32) -> (i32, i32, i32) {
    %c0_i32 = arith.constant 0 : i32
    %c0_i32_0 = arith.constant 0 : i32
    %c0_i32_1 = arith.constant 0 : i32
    return %arg1, %c0_i32, %c0_i32_0 : i32, i32, i32
  }
  func.func @transform_4(%arg0: i32, %arg1: i32) -> (i32, i32, i32) {
    %c0_i32 = arith.constant 0 : i32
    %c0_i32_0 = arith.constant 0 : i32
    %c0_i32_1 = arith.constant 0 : i32
    return %arg1, %c0_i32, %c0_i32_0 : i32, i32, i32
  }
  func.func @transform_5(%arg0: i32, %arg1: i32) -> (i32, i32, i32) {
    %c0_i32 = arith.constant 0 : i32
    %c0_i32_0 = arith.constant 0 : i32
    %c0_i32_1 = arith.constant 0 : i32
    return %arg1, %c0_i32, %c0_i32_0 : i32, i32, i32
  }
  func.func @transform_6(%arg0: i32, %arg1: i32) -> (i32, i32, i32) {
    %c0_i32 = arith.constant 0 : i32
    %c0_i32_0 = arith.constant 0 : i32
    %c0_i32_1 = arith.constant 0 : i32
    return %arg1, %c0_i32, %c0_i32_0 : i32, i32, i32
  }
  func.func @transform_7(%arg0: i32, %arg1: i32) -> (i32, i32, i32) {
    %c0_i32 = arith.constant 0 : i32
    %c0_i32_0 = arith.constant 0 : i32
    %c0_i32_1 = arith.constant 0 : i32
    return %arg1, %c0_i32, %c0_i32_0 : i32, i32, i32
  }
  func.func @transform_8(%arg0: i32, %arg1: i32) -> (i32, i32, i32) {
    %c0_i32 = arith.constant 0 : i32
    %c0_i32_0 = arith.constant 0 : i32
    %c0_i32_1 = arith.constant 0 : i32
    return %arg0, %c0_i32, %c0_i32_0 : i32, i32, i32
  }
}

</mosaic_0001>

<llo_original>
// kernel: tpu_custom_call.1
$region0: #{tpu_custom_call.1}
  #allocation0 [shape = 'u32[]', space=smem, size = 0x4, offset = 0x4, fixed_abs, tag = 'smem constant byte address 0x4 - core index']
  #allocation1 [shape = 'u32[144,128]{1,0:T(1,128)}', space=vmem, size = 0x12000, scoped, tag = 'internal scratch']
  %s0 = inlined_call_operand.hbm [shape: f32[2,8,32], index: 0, kind: input, shape index: {}]
  %s1 = inlined_call_operand.hbm [shape: bf16[2,32,96], index: 1, kind: input, shape index: {}]
  %s2 = inlined_call_operand.hbm [shape: f32[2,1,96], index: 2, kind: input, shape index: {}]
  %s3 = inlined_call_operand.hbm [shape: bf16[2,32,32], index: 3, kind: input, shape index: {}]
  %s4 = inlined_call_operand.hbm [shape: bf16[2,32,512], index: 4, kind: input, shape index: {}]
  %s5 = inlined_call_operand.hbm [shape: f32[2,1,512], index: 5, kind: input, shape index: {}]
  %s6 = inlined_call_operand.hbm [shape: bf16[2,512,32], index: 6, kind: input, shape index: {}]
  %s7 = inlined_call_operand.hbm [shape: f32[2,6,32], index: 7, kind: input, shape index: {}]
  %s8 = inlined_call_operand.hbm [shape: f32[2,8,32], index: 8, kind: output, shape index: {}]
  %s9 = sld [smem:[#allocation0]]
  $region101: #{tpu_custom_call.1} parent=0
    _
  %s11 = ssub.s32 1, %s9
  %s12 = scalar_select 0, %s11, %s9
  $region1: #{tpu_custom_call.1} parent=0
    #allocation2 [shape = 'u8[8192]{0}', space=vmem, size = 0x2000, scoped, tag = 'input window, operand 0']
    #allocation3 [shape = 's32[2]{0}', space=sflag, size = 0x8, scoped, tag = 'scoped memory for tpu_custom_call.1']
    #allocation4 [shape = 's32[2]{0}', space=sflag, size = 0x8, scoped, tag = 'scoped memory for tpu_custom_call.1']
    #allocation5 [shape = 'u8[16384]{0}', space=vmem, size = 0x4000, scoped, tag = 'input window, operand 1']
    #allocation6 [shape = 's32[2]{0}', space=sflag, size = 0x8, scoped, tag = 'scoped memory for tpu_custom_call.1']
    #allocation7 [shape = 'u8[1024]{0}', space=vmem, size = 0x400, scoped, tag = 'input window, operand 2']
    #allocation8 [shape = 'u8[16384]{0}', space=vmem, size = 0x4000, scoped, tag = 'input window, operand 3']
    #allocation9 [shape = 's32[2]{0}', space=sflag, size = 0x8, scoped, tag = 'scoped memory for tpu_custom_call.1']
    #allocation10 [shape = 'u8[65536]{0}', space=vmem, size = 0x10000, scoped, tag = 'input window, operand 4']
    #allocation11 [shape = 'u8[4096]{0}', space=vmem, size = 0x1000, scoped, tag = 'input window, operand 5']
    #allocation12 [shape = 's32[2]{0}', space=sflag, size = 0x8, scoped, tag = 'scoped memory for tpu_custom_call.1']
    #allocation13 [shape = 'u8[262144]{0}', space=vmem, size = 0x40000, scoped, tag = 'input window, operand 6']
    #allocation14 [shape = 'u8[8192]{0}', space=vmem, size = 0x2000, scoped, tag = 'input window, operand 7']
    #allocation15 [shape = 's32[2]{0}', space=sflag, size = 0x8, scoped, tag = 'scoped memory for tpu_custom_call.1']
    #allocation16 [shape = 'u8[8192]{0}', space=vmem, size = 0x2000, scoped, tag = 'output window, operand 0']
    %13 = vsyncpa [#allocation3], 0
    %s14 = scalar_lea.sflag [#allocation3], 1
    %15 = vsyncpa %s14, 0
    %16 = vsyncpa [#allocation6], 0
    %s17 = scalar_lea.sflag [#allocation6], 1
    %18 = vsyncpa %s17, 0
    %19 = vsyncpa [#allocation9], 0
    %s20 = scalar_lea.sflag [#allocation9], 1
    %21 = vsyncpa %s20, 0
    %22 = vsyncpa [#allocation12], 0
    %s23 = scalar_lea.sflag [#allocation12], 1
    %24 = vsyncpa %s23, 0
    %25 = vsyncpa [#allocation15], 0
    %s26 = scalar_lea.sflag [#allocation15], 1
    %27 = vsyncpa %s26, 0
    %28 = vsyncpa [#allocation4], 0
    %s29 = scalar_lea.sflag [#allocation4], 1
    %30 = vsyncpa %s29, 0
    loop: start=0, step=1, limit=6
    $region2: #{tpu_custom_call.1} parent=1 // loop_pre_header
      _
    $region3: #{tpu_custom_call.1} parent=1 // loop_header
      %s32 = sphi 0, %s36
      %p33 = scmp.ge.s32.totalorder %s32, 6
      %s39 = sphi 0, %s51
      %s40 = sphi 0, %s47
      %s41 = sphi 0, %s39
      %s42 = sphi 0, %s40
      %s43 = sphi 0, %s41
      %s44 = sphi 0, %s42
      %s54 = sphi 0, %s56
      %s57 = sphi 0, %s54
      %s58 = sphi 0, %s57
      %s74 = sphi 0, %s58
      %s80 = sphi 0, %s82
      %s83 = sphi 0, %s80
      %s84 = sphi 0, %s83
      %s100 = sphi 0, %s84
      %s106 = sphi 0, %s108
      %s109 = sphi 0, %s106
      %s110 = sphi 0, %s109
      %s126 = sphi 0, %s110
      %s132 = sphi 0, %s134
      %s135 = sphi 0, %s132
      %s136 = sphi 0, %s135
      %s152 = sphi 0, %s136
      %s158 = sphi 0, %s160
      %s161 = sphi 0, %s158
      %s162 = sphi 0, %s161
      %s178 = sphi 0, %s162
      %s184 = sphi 0, %s186
      %s187 = sphi 0, %s184
      %s188 = sphi 0, %s187
      %s204 = sphi 0, %s188
      %s210 = sphi 0, %s212
      %s213 = sphi 0, %s210
      %s214 = sphi 0, %s213
      %s230 = sphi 0, %s214
      %s236 = sphi 0, %s238
      %s239 = sphi 0, %s236
      %s240 = sphi 0, %s239
      %s256 = sphi 0, %s240
      %s262 = sphi 0, %s264
      %s265 = sphi 0, %s262
      %s266 = sphi 0, %s265
      %s282 = sphi 0, %s266
    $region4: #{tpu_custom_call.1} parent=1 // loop_header_branch
      %35 = sbr.rel (%p33) target = $region8
    $region5: #{tpu_custom_call.1} parent=1 // loop_body
      %s37 = ssub.s32 %s32, 1
      %s38 = ssub.s32 %s32, 2
      %s45 = sadd.s32 1, %s40
      %p46 = scmp.ge.s32.totalorder %s45, 2
      %s47 = scalar_select %p46, 0, %s45
      %s48 = sadd.s32 1, %s39
      %s49 = scalar_select %p46, %s48, %s39
      %p50 = scmp.ge.s32.totalorder %s49, 2
      %s51 = scalar_select %p50, 0, %s49
      %s52 = ssub.s32 %s39, %s51
      %p53 = scmp.eq.s32.totalorder %s52, 0
      %s55 = sadd.s32 %s54, 1
      %s56 = scalar_select %p53, %s54, %s55
      %p59 = pneg %p53
      %p60 = scmp.eq.s32.totalorder %s32, 3
      %p61 = por %p59, %p60
      %p62 = scmp.ne.s32.totalorder %s54, %s57
      %p63 = scmp.eq.s32.totalorder %s32, 0
      %p64 = por %p62, %p63
      %p65 = scmp.ne.s32.totalorder %s54, %s57
      %p66 = scmp.eq.s32.totalorder %s37, 3
      %p67 = por %p65, %p66
      %p68 = scmp.ne.s32.totalorder %s57, %s58
      %p69 = scmp.eq.s32.totalorder %s37, 0
      %p70 = por %p68, %p69
      %p71 = scmp.ne.s32.totalorder %s57, %s58
      %p72 = scmp.eq.s32.totalorder %s38, 3
      %p73 = por %p71, %p72
      %p75 = scmp.ne.s32.totalorder %s58, %s74
      %p76 = scmp.eq.s32.totalorder %s38, 0
      %p77 = por %p75, %p76
      %s78 = ssub.s32 %s40, %s47
      %p79 = scmp.eq.s32.totalorder %s78, 0
      %s81 = sadd.s32 %s80, 1
      %s82 = scalar_select %p79, %s80, %s81
      %p85 = pneg %p79
      %p86 = scmp.eq.s32.totalorder %s32, 3
      %p87 = por %p85, %p86
      %p88 = scmp.ne.s32.totalorder %s80, %s83
      %p89 = scmp.eq.s32.totalorder %s32, 0
      %p90 = por %p88, %p89
      %p91 = scmp.ne.s32.totalorder %s80, %s83
      %p92 = scmp.eq.s32.totalorder %s37, 3
      %p93 = por %p91, %p92
      %p94 = scmp.ne.s32.totalorder %s83, %s84
      %p95 = scmp.eq.s32.totalorder %s37, 0
      %p96 = por %p94, %p95
      %p97 = scmp.ne.s32.totalorder %s83, %s84
      %p98 = scmp.eq.s32.totalorder %s38, 3
      %p99 = por %p97, %p98
      %p101 = scmp.ne.s32.totalorder %s84, %s100
      %p102 = scmp.eq.s32.totalorder %s38, 0
      %p103 = por %p101, %p102
      %s104 = ssub.s32 %s40, %s47
      %p105 = scmp.eq.s32.totalorder %s104, 0
      %s107 = sadd.s32 %s106, 1
      %s108 = scalar_select %p105, %s106, %s107
      %p111 = pneg %p105
      %p112 = scmp.eq.s32.totalorder %s32, 3
      %p113 = por %p111, %p112
      %p114 = scmp.ne.s32.totalorder %s106, %s109
      %p115 = scmp.eq.s32.totalorder %s32, 0
      %p116 = por %p114, %p115
      %p117 = scmp.ne.s32.totalorder %s106, %s109
      %p118 = scmp.eq.s32.totalorder %s37, 3
      %p119 = por %p117, %p118
      %p120 = scmp.ne.s32.totalorder %s109, %s110
      %p121 = scmp.eq.s32.totalorder %s37, 0
      %p122 = por %p120, %p121
      %p123 = scmp.ne.s32.totalorder %s109, %s110
      %p124 = scmp.eq.s32.totalorder %s38, 3
      %p125 = por %p123, %p124
      %p127 = scmp.ne.s32.totalorder %s110, %s126
      %p128 = scmp.eq.s32.totalorder %s38, 0
      %p129 = por %p127, %p128
      %s130 = ssub.s32 %s40, %s47
      %p131 = scmp.eq.s32.totalorder %s130, 0
      %s133 = sadd.s32 %s132, 1
      %s134 = scalar_select %p131, %s132, %s133
      %p137 = pneg %p131
      %p138 = scmp.eq.s32.totalorder %s32, 3
      %p139 = por %p137, %p138
      %p140 = scmp.ne.s32.totalorder %s132, %s135
      %p141 = scmp.eq.s32.totalorder %s32, 0
      %p142 = por %p140, %p141
      %p143 = scmp.ne.s32.totalorder %s132, %s135
      %p144 = scmp.eq.s32.totalorder %s37, 3
      %p145 = por %p143, %p144
      %p146 = scmp.ne.s32.totalorder %s135, %s136
      %p147 = scmp.eq.s32.totalorder %s37, 0
      %p148 = por %p146, %p147
      %p149 = scmp.ne.s32.totalorder %s135, %s136
      %p150 = scmp.eq.s32.totalorder %s38, 3
      %p151 = por %p149, %p150
      %p153 = scmp.ne.s32.totalorder %s136, %s152
      %p154 = scmp.eq.s32.totalorder %s38, 0
      %p155 = por %p153, %p154
      %s156 = ssub.s32 %s40, %s47
      %p157 = scmp.eq.s32.totalorder %s156, 0
      %s159 = sadd.s32 %s158, 1
      %s160 = scalar_select %p157, %s158, %s159
      %p163 = pneg %p157
      %p164 = scmp.eq.s32.totalorder %s32, 3
      %p165 = por %p163, %p164
      %p166 = scmp.ne.s32.totalorder %s158, %s161
      %p167 = scmp.eq.s32.totalorder %s32, 0
      %p168 = por %p166, %p167
      %p169 = scmp.ne.s32.totalorder %s158, %s161
      %p170 = scmp.eq.s32.totalorder %s37, 3
      %p171 = por %p169, %p170
      %p172 = scmp.ne.s32.totalorder %s161, %s162
      %p173 = scmp.eq.s32.totalorder %s37, 0
      %p174 = por %p172, %p173
      %p175 = scmp.ne.s32.totalorder %s161, %s162
      %p176 = scmp.eq.s32.totalorder %s38, 3
      %p177 = por %p175, %p176
      %p179 = scmp.ne.s32.totalorder %s162, %s178
      %p180 = scmp.eq.s32.totalorder %s38, 0
      %p181 = por %p179, %p180
      %s182 = ssub.s32 %s40, %s47
      %p183 = scmp.eq.s32.totalorder %s182, 0
      %s185 = sadd.s32 %s184, 1
      %s186 = scalar_select %p183, %s184, %s185
      %p189 = pneg %p183
      %p190 = scmp.eq.s32.totalorder %s32, 3
      %p191 = por %p189, %p190
      %p192 = scmp.ne.s32.totalorder %s184, %s187
      %p193 = scmp.eq.s32.totalorder %s32, 0
      %p194 = por %p192, %p193
      %p195 = scmp.ne.s32.totalorder %s184, %s187
      %p196 = scmp.eq.s32.totalorder %s37, 3
      %p197 = por %p195, %p196
      %p198 = scmp.ne.s32.totalorder %s187, %s188
      %p199 = scmp.eq.s32.totalorder %s37, 0
      %p200 = por %p198, %p199
      %p201 = scmp.ne.s32.totalorder %s187, %s188
      %p202 = scmp.eq.s32.totalorder %s38, 3
      %p203 = por %p201, %p202
      %p205 = scmp.ne.s32.totalorder %s188, %s204
      %p206 = scmp.eq.s32.totalorder %s38, 0
      %p207 = por %p205, %p206
      %s208 = ssub.s32 %s40, %s47
      %p209 = scmp.eq.s32.totalorder %s208, 0
      %s211 = sadd.s32 %s210, 1
      %s212 = scalar_select %p209, %s210, %s211
      %p215 = pneg %p209
      %p216 = scmp.eq.s32.totalorder %s32, 3
      %p217 = por %p215, %p216
      %p218 = scmp.ne.s32.totalorder %s210, %s213
      %p219 = scmp.eq.s32.totalorder %s32, 0
      %p220 = por %p218, %p219
      %p221 = scmp.ne.s32.totalorder %s210, %s213
      %p222 = scmp.eq.s32.totalorder %s37, 3
      %p223 = por %p221, %p222
      %p224 = scmp.ne.s32.totalorder %s213, %s214
      %p225 = scmp.eq.s32.totalorder %s37, 0
      %p226 = por %p224, %p225
      %p227 = scmp.ne.s32.totalorder %s213, %s214
      %p228 = scmp.eq.s32.totalorder %s38, 3
      %p229 = por %p227, %p228
      %p231 = scmp.ne.s32.totalorder %s214, %s230
      %p232 = scmp.eq.s32.totalorder %s38, 0
      %p233 = por %p231, %p232
      %s234 = ssub.s32 %s40, %s47
      %p235 = scmp.eq.s32.totalorder %s234, 0
      %s237 = sadd.s32 %s236, 1
      %s238 = scalar_select %p235, %s236, %s237
      %p241 = pneg %p235
      %p242 = scmp.eq.s32.totalorder %s32, 3
      %p243 = por %p241, %p242
      %p244 = scmp.ne.s32.totalorder %s236, %s239
      %p245 = scmp.eq.s32.totalorder %s32, 0
      %p246 = por %p244, %p245
      %p247 = scmp.ne.s32.totalorder %s236, %s239
      %p248 = scmp.eq.s32.totalorder %s37, 3
      %p249 = por %p247, %p248
      %p250 = scmp.ne.s32.totalorder %s239, %s240
      %p251 = scmp.eq.s32.totalorder %s37, 0
      %p252 = por %p250, %p251
      %p253 = scmp.ne.s32.totalorder %s239, %s240
      %p254 = scmp.eq.s32.totalorder %s38, 3
      %p255 = por %p253, %p254
      %p257 = scmp.ne.s32.totalorder %s240, %s256
      %p258 = scmp.eq.s32.totalorder %s38, 0
      %p259 = por %p257, %p258
      %s260 = ssub.s32 %s39, %s51
      %p261 = scmp.eq.s32.totalorder %s260, 0
      %s263 = sadd.s32 %s262, 1
      %s264 = scalar_select %p261, %s262, %s263
      %p267 = pneg %p261
      %p268 = scmp.eq.s32.totalorder %s32, 3
      %p269 = por %p267, %p268
      %p270 = scmp.ne.s32.totalorder %s262, %s265
      %p271 = scmp.eq.s32.totalorder %s32, 0
      %p272 = por %p270, %p271
      %p273 = scmp.ne.s32.totalorder %s262, %s265
      %p274 = scmp.eq.s32.totalorder %s37, 3
      %p275 = por %p273, %p274
      %p276 = scmp.ne.s32.totalorder %s265, %s266
      %p277 = scmp.eq.s32.totalorder %s37, 0
      %p278 = por %p276, %p277
      %p279 = scmp.ne.s32.totalorder %s265, %s266
      %p280 = scmp.eq.s32.totalorder %s38, 3
      %p281 = por %p279, %p280
      %p283 = scmp.ne.s32.totalorder %s266, %s282
      %p284 = scmp.eq.s32.totalorder %s38, 0
      %p285 = por %p283, %p284
      %p286 = scmp.le.s32.totalorder 1, %s32
      %p287 = scmp.lt.s32.totalorder %s32, 5
      %p288 = pnand %p286, %p287
      %p289 = pneg %p288
      // Predicated region
      $region9: #{tpu_custom_call.1} parent=5 // pred_check
        _
      $region10: #{tpu_custom_call.1} parent=5 // pred_check_branch
        %291 = sbr.rel (%p288) target = $region12
      $region11: #{tpu_custom_call.1} parent=5 // pred_region
        %s292 = ssub.s32 %s32, 1
      $region12: #{tpu_custom_call.1} parent=5 // pred_fallthru
        _
      %p293 = scmp.lt.s32.totalorder %s32, 4
      // Predicated region
      $region13: #{tpu_custom_call.1} parent=5 // pred_check
        %p294 = pneg %p293
      $region14: #{tpu_custom_call.1} parent=5 // pred_check_branch
        %296 = sbr.rel (%p294) target = $region16
      $region15: #{tpu_custom_call.1} parent=5 // pred_region
        // Predicated region
        $region17: #{tpu_custom_call.1} parent=15 // pred_check
          %p297 = pneg %p64
        $region18: #{tpu_custom_call.1} parent=15 // pred_check_branch
          %299 = sbr.rel (%p297) target = $region20
        $region19: #{tpu_custom_call.1} parent=15 // pred_region
          %s300 = sand.u32 %s54, 1
          %s301 = scalar_lea.sflag [#allocation3], %s300
          %s302 = sand.u32 %s54, 1
          %s303 = smul.addr %s302, 8
          %s304 = scalar_lea.vmem [#allocation2], %s303
          %s306 = ssub.s32 128, 128
          %307 = vsyncadd %s301, %s306
          %s308 = smul.addr %s39, 128
          %s309 = scalar_lea.hbm %s0, %s308
          %s311 = sshll.u32 %s304, 4
          %s312 = int_to_ptr.vmem [resolvable:$true] %s311
          %314 = dma.hbm_to_vmem [thread:$0]  %s309, 128, %s312, %s301
        $region20: #{tpu_custom_call.1} parent=15 // pred_fallthru
          _
        // Predicated region
        $region21: #{tpu_custom_call.1} parent=15 // pred_check
          %p315 = pneg %p90
        $region22: #{tpu_custom_call.1} parent=15 // pred_check_branch
          %317 = sbr.rel (%p315) target = $region24
        $region23: #{tpu_custom_call.1} parent=15 // pred_region
          %s318 = sand.u32 %s32, 1
          %s319 = scalar_lea.sflag [#allocation6], %s318
          %s320 = sand.u32 %s80, 1
          %s321 = smul.addr %s320, 16
          %s322 = scalar_lea.vmem [#allocation5], %s321
          %s324 = ssub.s32 256, 256
          %325 = vsyncadd %s319, %s324
          %s326 = smul.addr %s40, 4
          %s327 = smul.addr %s326, 64
          %s328 = scalar_lea.hbm %s1, %s327
          %s329 = sshll.u32 %s322, 4
          %s330 = int_to_ptr.vmem [resolvable:$true] %s329
          %335 = dma.hbm_to_vmem [thread:$0]  %s328, 256, %s330, %s319, 64, 64, 4
        $region24: #{tpu_custom_call.1} parent=15 // pred_fallthru
          _
        // Predicated region
        $region25: #{tpu_custom_call.1} parent=15 // pred_check
          %p336 = pneg %p116
        $region26: #{tpu_custom_call.1} parent=15 // pred_check_branch
          %338 = sbr.rel (%p336) target = $region28
        $region27: #{tpu_custom_call.1} parent=15 // pred_region
          %s339 = sand.u32 %s32, 1
          %s340 = scalar_lea.sflag [#allocation6], %s339
          %s341 = sand.u32 %s106, 1
          %s342 = scalar_lea.vmem [#allocation7], %s341
          %s344 = ssub.s32 16, 16
          %345 = vsyncadd %s340, %s344
          %s346 = smul.addr %s40, 16
          %s347 = scalar_lea.hbm %s2, %s346
          %s349 = sshll.u32 %s342, 4
          %s350 = int_to_ptr.vmem [resolvable:$true] %s349
          %352 = dma.hbm_to_vmem [thread:$0]  %s347, 16, %s350, %s340
        $region28: #{tpu_custom_call.1} parent=15 // pred_fallthru
          _
        // Predicated region
        $region29: #{tpu_custom_call.1} parent=15 // pred_check
          %p353 = pneg %p142
        $region30: #{tpu_custom_call.1} parent=15 // pred_check_branch
          %355 = sbr.rel (%p353) target = $region32
        $region31: #{tpu_custom_call.1} parent=15 // pred_region
          %s356 = sand.u32 %s32, 1
          %s357 = scalar_lea.sflag [#allocation9], %s356
          %s358 = sand.u32 %s132, 1
          %s359 = smul.addr %s358, 16
          %s360 = scalar_lea.vmem [#allocation8], %s359
          %s362 = ssub.s32 256, 256
          %363 = vsyncadd %s357, %s362
          %s364 = smul.addr %s40, 4
          %s365 = smul.addr %s364, 64
          %s366 = scalar_lea.hbm %s3, %s365
          %s367 = sshll.u32 %s360, 4
          %s368 = int_to_ptr.vmem [resolvable:$true] %s367
          %373 = dma.hbm_to_vmem [thread:$0]  %s366, 256, %s368, %s357, 64, 64, 4
        $region32: #{tpu_custom_call.1} parent=15 // pred_fallthru
          _
        // Predicated region
        $region33: #{tpu_custom_call.1} parent=15 // pred_check
          %p374 = pneg %p168
        $region34: #{tpu_custom_call.1} parent=15 // pred_check_branch
          %376 = sbr.rel (%p374) target = $region36
        $region35: #{tpu_custom_call.1} parent=15 // pred_region
          %s377 = sand.u32 %s32, 1
          %s378 = scalar_lea.sflag [#allocation9], %s377
          %s379 = sand.u32 %s158, 1
          %s380 = smul.addr %s379, 64
          %s381 = scalar_lea.vmem [#allocation10], %s380
          %s383 = ssub.s32 1024, 1024
          %384 = vsyncadd %s378, %s383
          %s385 = smul.addr %s40, 16
          %s386 = smul.addr %s385, 64
          %s387 = scalar_lea.hbm %s4, %s386
          %s388 = sshll.u32 %s381, 4
          %s389 = int_to_ptr.vmem [resolvable:$true] %s388
          %394 = dma.hbm_to_vmem [thread:$0]  %s387, 1024, %s389, %s378, 256, 256, 16
        $region36: #{tpu_custom_call.1} parent=15 // pred_fallthru
          _
        // Predicated region
        $region37: #{tpu_custom_call.1} parent=15 // pred_check
          %p395 = pneg %p194
        $region38: #{tpu_custom_call.1} parent=15 // pred_check_branch
          %397 = sbr.rel (%p395) target = $region40
        $region39: #{tpu_custom_call.1} parent=15 // pred_region
          %s398 = sand.u32 %s32, 1
          %s399 = scalar_lea.sflag [#allocation12], %s398
          %s400 = sand.u32 %s184, 1
          %s401 = smul.addr %s400, 4
          %s402 = scalar_lea.vmem [#allocation11], %s401
          %s404 = ssub.s32 64, 64
          %405 = vsyncadd %s399, %s404
          %s406 = smul.addr %s40, 4
          %s407 = smul.addr %s406, 16
          %s408 = scalar_lea.hbm %s5, %s407
          %s410 = sshll.u32 %s402, 4
          %s411 = int_to_ptr.vmem [resolvable:$true] %s410
          %413 = dma.hbm_to_vmem [thread:$0]  %s408, 64, %s411, %s399
        $region40: #{tpu_custom_call.1} parent=15 // pred_fallthru
          _
        // Predicated region
        $region41: #{tpu_custom_call.1} parent=15 // pred_check
          %p414 = pneg %p220
        $region42: #{tpu_custom_call.1} parent=15 // pred_check_branch
          %416 = sbr.rel (%p414) target = $region44
        $region43: #{tpu_custom_call.1} parent=15 // pred_region
          %s417 = sand.u32 %s32, 1
          %s418 = scalar_lea.sflag [#allocation12], %s417
          %s419 = sand.u32 %s210, 1
          %s420 = smul.addr %s419, 256
          %s421 = scalar_lea.vmem [#allocation13], %s420
          %s423 = ssub.s32 4096, 4096
          %424 = vsyncadd %s418, %s423
          %s425 = smul.addr %s40, 64
          %s426 = smul.addr %s425, 64
          %s427 = scalar_lea.hbm %s6, %s426
          %s428 = sshll.u32 %s421, 4
          %s429 = int_to_ptr.vmem [resolvable:$true] %s428
          %434 = dma.hbm_to_vmem [thread:$0]  %s427, 4096, %s429, %s418, 64, 64, 4
        $region44: #{tpu_custom_call.1} parent=15 // pred_fallthru
          _
        // Predicated region
        $region45: #{tpu_custom_call.1} parent=15 // pred_check
          %p435 = pneg %p246
        $region46: #{tpu_custom_call.1} parent=15 // pred_check_branch
          %437 = sbr.rel (%p435) target = $region48
        $region47: #{tpu_custom_call.1} parent=15 // pred_region
          %s438 = sand.u32 %s236, 1
          %s439 = scalar_lea.sflag [#allocation15], %s438
          %s440 = sand.u32 %s236, 1
          %s441 = smul.addr %s440, 8
          %s442 = scalar_lea.vmem [#allocation14], %s441
          %s444 = ssub.s32 128, 128
          %445 = vsyncadd %s439, %s444
          %s446 = smul.addr %s40, 128
          %s447 = scalar_lea.hbm %s7, %s446
          %s449 = sshll.u32 %s442, 4
          %s450 = int_to_ptr.vmem [resolvable:$true] %s449
          %452 = dma.hbm_to_vmem [thread:$0]  %s447, 128, %s450, %s439
        $region48: #{tpu_custom_call.1} parent=15 // pred_fallthru
          _
      $region16: #{tpu_custom_call.1} parent=5 // pred_fallthru
        _
      %p453 = scmp.le.s32.totalorder 1, %s32
      %p454 = scmp.lt.s32.totalorder %s32, 5
      %p455 = pnand %p453, %p454
      %p456 = pneg %p455
      // Predicated region
      $region49: #{tpu_custom_call.1} parent=5 // pred_check
        _
      $region50: #{tpu_custom_call.1} parent=5 // pred_check_branch
        %458 = sbr.rel (%p455) target = $region52
      $region51: #{tpu_custom_call.1} parent=5 // pred_region
        %s459 = ssub.s32 %s32, 1
        %s460 = sand.u32 %s57, 1
        %s461 = scalar_lea.sflag [#allocation3], %s460
        %s462 = sand.u32 %s57, 1
        %s463 = smul.addr %s462, 8
        %s464 = scalar_lea.vmem [#allocation2], %s463
        // Predicated region
        $region53: #{tpu_custom_call.1} parent=51 // pred_check
          %p465 = pneg %p70
        $region54: #{tpu_custom_call.1} parent=51 // pred_check_branch
          %467 = sbr.rel (%p465) target = $region56
        $region55: #{tpu_custom_call.1} parent=51 // pred_region
          %468 = dma.done %s461, 128
        $region56: #{tpu_custom_call.1} parent=51 // pred_fallthru
          _
        %s469 = sand.u32 %s37, 1
        %s470 = scalar_lea.sflag [#allocation6], %s469
        %s471 = sand.u32 %s83, 1
        %s472 = smul.addr %s471, 16
        %s473 = scalar_lea.vmem [#allocation5], %s472
        // Predicated region
        $region57: #{tpu_custom_call.1} parent=51 // pred_check
          %p474 = pneg %p96
        $region58: #{tpu_custom_call.1} parent=51 // pred_check_branch
          %476 = sbr.rel (%p474) target = $region60
        $region59: #{tpu_custom_call.1} parent=51 // pred_region
          %477 = dma.done %s470, 256
        $region60: #{tpu_custom_call.1} parent=51 // pred_fallthru
          _
        %s478 = sand.u32 %s37, 1
        %s479 = scalar_lea.sflag [#allocation6], %s478
        %s480 = sand.u32 %s109, 1
        %s481 = scalar_lea.vmem [#allocation7], %s480
        // Predicated region
        $region61: #{tpu_custom_call.1} parent=51 // pred_check
          %p482 = pneg %p122
        $region62: #{tpu_custom_call.1} parent=51 // pred_check_branch
          %484 = sbr.rel (%p482) target = $region64
        $region63: #{tpu_custom_call.1} parent=51 // pred_region
          %485 = dma.done %s479, 16
        $region64: #{tpu_custom_call.1} parent=51 // pred_fallthru
          _
        %s486 = sand.u32 %s37, 1
        %s487 = scalar_lea.sflag [#allocation9], %s486
        %s488 = sand.u32 %s135, 1
        %s489 = smul.addr %s488, 16
        %s490 = scalar_lea.vmem [#allocation8], %s489
        // Predicated region
        $region65: #{tpu_custom_call.1} parent=51 // pred_check
          %p491 = pneg %p148
        $region66: #{tpu_custom_call.1} parent=51 // pred_check_branch
          %493 = sbr.rel (%p491) target = $region68
        $region67: #{tpu_custom_call.1} parent=51 // pred_region
          %494 = dma.done %s487, 256
        $region68: #{tpu_custom_call.1} parent=51 // pred_fallthru
          _
        %s495 = sand.u32 %s37, 1
        %s496 = scalar_lea.sflag [#allocation9], %s495
        %s497 = sand.u32 %s161, 1
        %s498 = smul.addr %s497, 64
        %s499 = scalar_lea.vmem [#allocation10], %s498
        // Predicated region
        $region69: #{tpu_custom_call.1} parent=51 // pred_check
          %p500 = pneg %p174
        $region70: #{tpu_custom_call.1} parent=51 // pred_check_branch
          %502 = sbr.rel (%p500) target = $region72
        $region71: #{tpu_custom_call.1} parent=51 // pred_region
          %503 = dma.done %s496, 1024
        $region72: #{tpu_custom_call.1} parent=51 // pred_fallthru
          _
        %s504 = sand.u32 %s37, 1
        %s505 = scalar_lea.sflag [#allocation12], %s504
        %s506 = sand.u32 %s187, 1
        %s507 = smul.addr %s506, 4
        %s508 = scalar_lea.vmem [#allocation11], %s507
        // Predicated region
        $region73: #{tpu_custom_call.1} parent=51 // pred_check
          %p509 = pneg %p200
        $region74: #{tpu_custom_call.1} parent=51 // pred_check_branch
          %511 = sbr.rel (%p509) target = $region76
        $region75: #{tpu_custom_call.1} parent=51 // pred_region
          %512 = dma.done %s505, 64
        $region76: #{tpu_custom_call.1} parent=51 // pred_fallthru
          _
        %s513 = sand.u32 %s37, 1
        %s514 = scalar_lea.sflag [#allocation12], %s513
        %s515 = sand.u32 %s213, 1
        %s516 = smul.addr %s515, 256
        %s517 = scalar_lea.vmem [#allocation13], %s516
        // Predicated region
        $region77: #{tpu_custom_call.1} parent=51 // pred_check
          %p518 = pneg %p226
        $region78: #{tpu_custom_call.1} parent=51 // pred_check_branch
          %520 = sbr.rel (%p518) target = $region80
        $region79: #{tpu_custom_call.1} parent=51 // pred_region
          %521 = dma.done %s514, 4096
        $region80: #{tpu_custom_call.1} parent=51 // pred_fallthru
          _
        %s522 = sand.u32 %s239, 1
        %s523 = scalar_lea.sflag [#allocation15], %s522
        %s524 = sand.u32 %s239, 1
        %s525 = smul.addr %s524, 8
        %s526 = scalar_lea.vmem [#allocation14], %s525
        // Predicated region
        $region81: #{tpu_custom_call.1} parent=51 // pred_check
          %p527 = pneg %p252
        $region82: #{tpu_custom_call.1} parent=51 // pred_check_branch
          %529 = sbr.rel (%p527) target = $region84
        $region83: #{tpu_custom_call.1} parent=51 // pred_region
          %530 = dma.done %s523, 128
        $region84: #{tpu_custom_call.1} parent=51 // pred_fallthru
          _
        %s531 = sand.u32 %s57, 1
        %s532 = scalar_lea.sflag [#allocation3], %s531
        %s533 = sand.u32 %s57, 1
        %s534 = smul.addr %s533, 8
        %s535 = scalar_lea.vmem [#allocation2], %s534
        %p536 = pneg %p70
        %p537 = pneg %p67
        %s538 = sand.u32 %s37, 1
        %s539 = scalar_lea.sflag [#allocation6], %s538
        %s540 = sand.u32 %s83, 1
        %s541 = smul.addr %s540, 16
        %s542 = scalar_lea.vmem [#allocation5], %s541
        %p543 = pneg %p96
        %p544 = pneg %p93
        %s545 = sand.u32 %s37, 1
        %s546 = scalar_lea.sflag [#allocation6], %s545
        %s547 = sand.u32 %s109, 1
        %s548 = scalar_lea.vmem [#allocation7], %s547
        %p549 = pneg %p122
        %p550 = pneg %p119
        %s551 = sand.u32 %s37, 1
        %s552 = scalar_lea.sflag [#allocation9], %s551
        %s553 = sand.u32 %s135, 1
        %s554 = smul.addr %s553, 16
        %s555 = scalar_lea.vmem [#allocation8], %s554
        %p556 = pneg %p148
        %p557 = pneg %p145
        %s558 = sand.u32 %s37, 1
        %s559 = scalar_lea.sflag [#allocation9], %s558
        %s560 = sand.u32 %s161, 1
        %s561 = smul.addr %s560, 64
        %s562 = scalar_lea.vmem [#allocation10], %s561
        %p563 = pneg %p174
        %p564 = pneg %p171
        %s565 = sand.u32 %s37, 1
        %s566 = scalar_lea.sflag [#allocation12], %s565
        %s567 = sand.u32 %s187, 1
        %s568 = smul.addr %s567, 4
        %s569 = scalar_lea.vmem [#allocation11], %s568
        %p570 = pneg %p200
        %p571 = pneg %p197
        %s572 = sand.u32 %s37, 1
        %s573 = scalar_lea.sflag [#allocation12], %s572
        %s574 = sand.u32 %s213, 1
        %s575 = smul.addr %s574, 256
        %s576 = scalar_lea.vmem [#allocation13], %s575
        %p577 = pneg %p226
        %p578 = pneg %p223
        %s579 = sand.u32 %s239, 1
        %s580 = scalar_lea.sflag [#allocation15], %s579
        %s581 = sand.u32 %s239, 1
        %s582 = smul.addr %s581, 8
        %s583 = scalar_lea.vmem [#allocation14], %s582
        %p584 = pneg %p252
        %p585 = pneg %p249
        %p586 = pneg %p278
        %p587 = pneg %p275
        %s588 = sand.u32 %s265, 1
        %s589 = scalar_lea.sflag [#allocation4], %s588
        %s590 = sand.u32 %s265, 1
        %s591 = smul.addr %s590, 8
        %s592 = scalar_lea.vmem [#allocation16], %s591
        %p594 = scmp.eq.s32.totalorder %s42, 0
        // Predicated region
        $region85: #{tpu_custom_call.1} parent=51 // pred_check
          %p595 = pneg %p594
        $region86: #{tpu_custom_call.1} parent=51 // pred_check_branch
          %597 = sbr.rel (%p595) target = $region88
        $region87: #{tpu_custom_call.1} parent=51 // pred_region
          %v598 = vld [vmem:[%s464] sm:$0xff]
          %vm599 = vcmask 261120
          %600 = vst.msk [vmem:[%s592] sm:$0xff] %vm599, %v598
        $region88: #{tpu_custom_call.1} parent=51 // pred_fallthru
          _
        %v601 = vld [vmem:[%s592] sm:$0xff]
        %v602 = vpack.c.bf16 %v601, %v601
        %v603 = vld [vmem:[%s526] sm:$0x3f]
        %v604 = vld [vmem:[%s473] sm:$0xf]
        %v605 = vld [vmem:[%s473 + $0x4] sm:$0xf]
        %v606 = vld [vmem:[%s473 + $0x8] sm:$0xf]
        %v607 = vld [vmem:[%s473 + $0xc] sm:$0xf]
        %v608 = vld [vmem:[%s481] sm:$0x1]
        %v610 = vlaneseq
        %v611 = vshrl.u32 %v610, 7
        %v612 = vsub.s32 0, %v611
        %v613 = vrot.slane %v608, %v612
        %v619 = vunpack.c.l.b16 %v604
        %v620 = vunpack.c.l.b16 %v605
        %v621 = vunpack.c.l.b16 %v606
        %v622 = vunpack.c.l.b16 %v607
        %v623 = vpack.c.b16 %v620, %v619
        %v624 = vpack.c.b16 %v622, %v621
        %vm627 = vcmask 261120
        %v629 = vsel %vm627, %v602, 0
        %631 = vmatprep.subr.bf16.mxu0 0
        %632 = vmatpush1.bf16.msra.mxu0 %v623
        %633 = vmatprep.subr.bf16.mxu0 0
        %634 = vmatpush1.bf16.msra.mxu0 %v624
        %635 = vmatprep.subr.bf16.mxu0 0
        %636 = vmatpush1.bf16.msra.mxu0 0
        %637 = vmatprep.subr.bf16.mxu0 0
        %638 = vmatpush1.bf16.msra.mxu0 0
        %639 = vmatprep.subr.bf16.mxu0 0
        %640 = vmatpush1.bf16.msra.mxu0 0
        %641 = vmatprep.subr.bf16.mxu0 0
        %642 = vmatpush1.bf16.msra.mxu0 0
        %643 = vmatprep.subr.bf16.mxu0 0
        %644 = vmatpush1.bf16.msra.mxu0 0
        %645 = vmatprep.subr.bf16.mxu0 0
        %646 = vmatpush1.bf16.msra.mxu0 0
        %647 = vmatprep.subr.bf16.mxu0 0
        %648 = vmatpush1.bf16.msra.mxu0 0
        %649 = vmatprep.subr.bf16.mxu0 0
        %650 = vmatpush1.bf16.msra.mxu0 0
        %651 = vmatprep.subr.bf16.mxu0 0
        %652 = vmatpush1.bf16.msra.mxu0 0
        %653 = vmatprep.subr.bf16.mxu0 0
        %654 = vmatpush1.bf16.msra.mxu0 0
        %655 = vmatprep.subr.bf16.mxu0 0
        %656 = vmatpush1.bf16.msra.mxu0 0
        %657 = vmatprep.subr.bf16.mxu0 0
        %658 = vmatpush1.bf16.msra.mxu0 0
        %659 = vmatprep.subr.bf16.mxu0 0
        %660 = vmatpush1.bf16.msra.mxu0 0
        %661 = vmatprep.subr.bf16.mxu0 0
        %662 = vmatpush1.bf16.msra.mxu0 0
        %663 = vmatprep.mubr.bf16.mxu0 0
        %664 = vmatmul.mubr.bf16.gmra.mrb[0].mxu0 %v629
        %v665 = vpop.f32.mrb[0].mxu0
        %v666 = vadd.f32 %v613, %v665
        %v667 = vpop.f32.mrb[0].mxu0
        %v668 = vpop.f32.mrb[0].mxu0
        %v669 = vpop.f32.mrb[0].mxu0
        %670 = vdwg.mxu0
        %v671 = vpack.c.bf16 %v666, %v666
        %673 = vrot.lane.b32.xlu0 %v671, 96
        %v674 = vpop.permute.xlu0 %673
        %vm675 = vcmask 64512
        %v677 = vsel %vm675, %v671, 0
        %v680 = vsel %vm675, %v674, 0
        %682 = vmatprep.subr.bf16.mxu0 0
        %683 = vmatpush1.bf16.xpose.msra.mxu0 %v680
        %684 = vmatprep.subr.bf16.mxu0 0
        %685 = vmatpush1.bf16.xpose.msra.mxu0 0
        %686 = vmatprep.subr.bf16.mxu0 0
        %687 = vmatpush1.bf16.xpose.msra.mxu0 0
        %688 = vmatprep.subr.bf16.mxu0 0
        %689 = vmatpush1.bf16.xpose.msra.mxu0 0
        %690 = vmatprep.subr.bf16.mxu0 0
        %691 = vmatpush1.bf16.xpose.msra.mxu0 0
        %692 = vmatprep.subr.bf16.mxu0 0
        %693 = vmatpush1.bf16.xpose.msra.mxu0 0
        %694 = vmatprep.subr.bf16.mxu0 0
        %695 = vmatpush1.bf16.xpose.msra.mxu0 0
        %696 = vmatprep.subr.bf16.mxu0 0
        %697 = vmatpush1.bf16.xpose.msra.mxu0 0
        %698 = vmatprep.subr.bf16.mxu0 0
        %699 = vmatpush1.bf16.xpose.msra.mxu0 0
        %700 = vmatprep.subr.bf16.mxu0 0
        %701 = vmatpush1.bf16.xpose.msra.mxu0 0
        %702 = vmatprep.subr.bf16.mxu0 0
        %703 = vmatpush1.bf16.xpose.msra.mxu0 0
        %704 = vmatprep.subr.bf16.mxu0 0
        %705 = vmatpush1.bf16.xpose.msra.mxu0 0
        %706 = vmatprep.subr.bf16.mxu0 0
        %707 = vmatpush1.bf16.xpose.msra.mxu0 0
        %708 = vmatprep.subr.bf16.mxu0 0
        %709 = vmatpush1.bf16.xpose.msra.mxu0 0
        %710 = vmatprep.subr.bf16.mxu0 0
        %711 = vmatpush1.bf16.xpose.msra.mxu0 0
        %712 = vmatprep.subr.bf16.mxu0 0
        %713 = vmatpush1.bf16.xpose.msra.mxu0 0
        %714 = vmatprep.mubr.bf16.mxu0 0
        %715 = vmatmul.mubr.bf16.gmra.mrb[0].mxu0 %v677
        %v716 = vpop.f32.mrb[0].mxu0
        %v717 = vadd.f32 0.0, %v716
        %v718 = vpop.f32.mrb[0].mxu0
        %v719 = vpop.f32.mrb[0].mxu0
        %v720 = vpop.f32.mrb[0].mxu0
        %721 = vdwg.mxu0
        %v722 = vsel %vm675, %v717, -inf
        %723 = vmax.xlane.f32.xlu0 %v722
        %v724 = vpop.xlane.xlu0 %723
        %v725 = vsub.f32 %v717, %v724
        %v726 = vmul.f32 %v725, 1.442695
        %v727 = vpow.pop %v726
        %v728 = vsel %vm675, %v727, 0.0
        %729 = vadd.xlane.f32.xlu0 %v728
        %v730 = vpop.xlane.xlu0 %729
        %v731 = vrcp.pop %v730
        %v732 = vmul.f32 %v727, %v731
        %v733 = vpack.c.bf16 %v732, %v732
        %734 = vrot.lane.b32.xlu0 %v671, 64
        %v735 = vpop.permute.xlu0 %734
        %v737 = vsel %vm675, %v733, 0
        %vm739 = vcmask 1043456
        %v741 = vsel %vm739, %v735, 0
        %743 = vmatprep.subr.bf16.mxu0 0
        %744 = vmatpush1.bf16.msra.mxu0 %v741
        %745 = vmatprep.subr.bf16.mxu0 0
        %746 = vmatpush1.bf16.msra.mxu0 0
        %747 = vmatprep.subr.bf16.mxu0 0
        %748 = vmatpush1.bf16.msra.mxu0 0
        %749 = vmatprep.subr.bf16.mxu0 0
        %750 = vmatpush1.bf16.msra.mxu0 0
        %751 = vmatprep.subr.bf16.mxu0 0
        %752 = vmatpush1.bf16.msra.mxu0 0
        %753 = vmatprep.subr.bf16.mxu0 0
        %754 = vmatpush1.bf16.msra.mxu0 0
        %755 = vmatprep.subr.bf16.mxu0 0
        %756 = vmatpush1.bf16.msra.mxu0 0
        %757 = vmatprep.subr.bf16.mxu0 0
        %758 = vmatpush1.bf16.msra.mxu0 0
        %759 = vmatprep.subr.bf16.mxu0 0
        %760 = vmatpush1.bf16.msra.mxu0 0
        %761 = vmatprep.subr.bf16.mxu0 0
        %762 = vmatpush1.bf16.msra.mxu0 0
        %763 = vmatprep.subr.bf16.mxu0 0
        %764 = vmatpush1.bf16.msra.mxu0 0
        %765 = vmatprep.subr.bf16.mxu0 0
        %766 = vmatpush1.bf16.msra.mxu0 0
        %767 = vmatprep.subr.bf16.mxu0 0
        %768 = vmatpush1.bf16.msra.mxu0 0
        %769 = vmatprep.subr.bf16.mxu0 0
        %770 = vmatpush1.bf16.msra.mxu0 0
        %771 = vmatprep.subr.bf16.mxu0 0
        %772 = vmatpush1.bf16.msra.mxu0 0
        %773 = vmatprep.subr.bf16.mxu0 0
        %774 = vmatpush1.bf16.msra.mxu0 0
        %775 = vmatprep.mubr.bf16.mxu0 0
        %776 = vmatmul.mubr.bf16.gmra.mrb[0].mxu0 %v737
        %v777 = vpop.f32.mrb[0].mxu0
        %v778 = vadd.f32 0.0, %v777
        %v779 = vpop.f32.mrb[0].mxu0
        %v780 = vpop.f32.mrb[0].mxu0
        %v781 = vpop.f32.mrb[0].mxu0
        %782 = vdwg.mxu0
        %783 = vrot.lane.b32.xlu0 %v671, 120
        %v784 = vpop.permute.xlu0 %783
        %785 = vrot.lane.b32.xlu0 %v671, 88
        %v786 = vpop.permute.xlu0 %785
        %v788 = vsel %vm675, %v784, 0
        %v791 = vsel %vm675, %v786, 0
        %793 = vmatprep.subr.bf16.mxu0 0
        %794 = vmatpush1.bf16.xpose.msra.mxu0 %v791
        %795 = vmatprep.subr.bf16.mxu0 0
        %796 = vmatpush1.bf16.xpose.msra.mxu0 0
        %797 = vmatprep.subr.bf16.mxu0 0
        %798 = vmatpush1.bf16.xpose.msra.mxu0 0
        %799 = vmatprep.subr.bf16.mxu0 0
        %800 = vmatpush1.bf16.xpose.msra.mxu0 0
        %801 = vmatprep.subr.bf16.mxu0 0
        %802 = vmatpush1.bf16.xpose.msra.mxu0 0
        %803 = vmatprep.subr.bf16.mxu0 0
        %804 = vmatpush1.bf16.xpose.msra.mxu0 0
        %805 = vmatprep.subr.bf16.mxu0 0
        %806 = vmatpush1.bf16.xpose.msra.mxu0 0
        %807 = vmatprep.subr.bf16.mxu0 0
        %808 = vmatpush1.bf16.xpose.msra.mxu0 0
        %809 = vmatprep.subr.bf16.mxu0 0
        %810 = vmatpush1.bf16.xpose.msra.mxu0 0
        %811 = vmatprep.subr.bf16.mxu0 0
        %812 = vmatpush1.bf16.xpose.msra.mxu0 0
        %813 = vmatprep.subr.bf16.mxu0 0
        %814 = vmatpush1.bf16.xpose.msra.mxu0 0
        %815 = vmatprep.subr.bf16.mxu0 0
        %816 = vmatpush1.bf16.xpose.msra.mxu0 0
        %817 = vmatprep.subr.bf16.mxu0 0
        %818 = vmatpush1.bf16.xpose.msra.mxu0 0
        %819 = vmatprep.subr.bf16.mxu0 0
        %820 = vmatpush1.bf16.xpose.msra.mxu0 0
        %821 = vmatprep.subr.bf16.mxu0 0
        %822 = vmatpush1.bf16.xpose.msra.mxu0 0
        %823 = vmatprep.subr.bf16.mxu0 0
        %824 = vmatpush1.bf16.xpose.msra.mxu0 0
        %825 = vmatprep.mubr.bf16.mxu0 0
        %826 = vmatmul.mubr.bf16.gmra.mrb[0].mxu0 %v788
        %v827 = vpop.f32.mrb[0].mxu0
        %v828 = vadd.f32 0.0, %v827
        %v829 = vpop.f32.mrb[0].mxu0
        %v830 = vpop.f32.mrb[0].mxu0
        %v831 = vpop.f32.mrb[0].mxu0
        %832 = vdwg.mxu0
        %v833 = vsel %vm675, %v828, -inf
        %834 = vmax.xlane.f32.xlu0 %v833
        %v835 = vpop.xlane.xlu0 %834
        %v836 = vsub.f32 %v828, %v835
        %v837 = vmul.f32 %v836, 1.442695
        %v838 = vpow.pop %v837
        %v839 = vsel %vm675, %v838, 0.0
        %840 = vadd.xlane.f32.xlu0 %v839
        %v841 = vpop.xlane.xlu0 %840
        %v842 = vrcp.pop %v841
        %v843 = vmul.f32 %v838, %v842
        %v844 = vpack.c.bf16 %v843, %v843
        %845 = vrot.lane.b32.xlu0 %v671, 56
        %v846 = vpop.permute.xlu0 %845
        %v848 = vsel %vm675, %v844, 0
        %v851 = vsel %vm739, %v846, 0
        %853 = vmatprep.subr.bf16.mxu0 0
        %854 = vmatpush1.bf16.msra.mxu0 %v851
        %855 = vmatprep.subr.bf16.mxu0 0
        %856 = vmatpush1.bf16.msra.mxu0 0
        %857 = vmatprep.subr.bf16.mxu0 0
        %858 = vmatpush1.bf16.msra.mxu0 0
        %859 = vmatprep.subr.bf16.mxu0 0
        %860 = vmatpush1.bf16.msra.mxu0 0
        %861 = vmatprep.subr.bf16.mxu0 0
        %862 = vmatpush1.bf16.msra.mxu0 0
        %863 = vmatprep.subr.bf16.mxu0 0
        %864 = vmatpush1.bf16.msra.mxu0 0
        %865 = vmatprep.subr.bf16.mxu0 0
        %866 = vmatpush1.bf16.msra.mxu0 0
        %867 = vmatprep.subr.bf16.mxu0 0
        %868 = vmatpush1.bf16.msra.mxu0 0
        %869 = vmatprep.subr.bf16.mxu0 0
        %870 = vmatpush1.bf16.msra.mxu0 0
        %871 = vmatprep.subr.bf16.mxu0 0
        %872 = vmatpush1.bf16.msra.mxu0 0
        %873 = vmatprep.subr.bf16.mxu0 0
        %874 = vmatpush1.bf16.msra.mxu0 0
        %875 = vmatprep.subr.bf16.mxu0 0
        %876 = vmatpush1.bf16.msra.mxu0 0
        %877 = vmatprep.subr.bf16.mxu0 0
        %878 = vmatpush1.bf16.msra.mxu0 0
        %879 = vmatprep.subr.bf16.mxu0 0
        %880 = vmatpush1.bf16.msra.mxu0 0
        %881 = vmatprep.subr.bf16.mxu0 0
        %882 = vmatpush1.bf16.msra.mxu0 0
        %883 = vmatprep.subr.bf16.mxu0 0
        %884 = vmatpush1.bf16.msra.mxu0 0
        %885 = vmatprep.mubr.bf16.mxu0 0
        %886 = vmatmul.mubr.bf16.gmra.mrb[0].mxu0 %v848
        %v887 = vpop.f32.mrb[0].mxu0
        %v888 = vadd.f32 0.0, %v887
        %v889 = vpop.f32.mrb[0].mxu0
        %v890 = vpop.f32.mrb[0].mxu0
        %v891 = vpop.f32.mrb[0].mxu0
        %892 = vdwg.mxu0
        %893 = vrot.lane.b32.xlu0 %v671, 112
        %v894 = vpop.permute.xlu0 %893
        %895 = vrot.lane.b32.xlu0 %v671, 80
        %v896 = vpop.permute.xlu0 %895
        %v898 = vsel %vm675, %v894, 0
        %v901 = vsel %vm675, %v896, 0
        %903 = vmatprep.subr.bf16.mxu0 0
        %904 = vmatpush1.bf16.xpose.msra.mxu0 %v901
        %905 = vmatprep.subr.bf16.mxu0 0
        %906 = vmatpush1.bf16.xpose.msra.mxu0 0
        %907 = vmatprep.subr.bf16.mxu0 0
        %908 = vmatpush1.bf16.xpose.msra.mxu0 0
        %909 = vmatprep.subr.bf16.mxu0 0
        %910 = vmatpush1.bf16.xpose.msra.mxu0 0
        %911 = vmatprep.subr.bf16.mxu0 0
        %912 = vmatpush1.bf16.xpose.msra.mxu0 0
        %913 = vmatprep.subr.bf16.mxu0 0
        %914 = vmatpush1.bf16.xpose.msra.mxu0 0
        %915 = vmatprep.subr.bf16.mxu0 0
        %916 = vmatpush1.bf16.xpose.msra.mxu0 0
        %917 = vmatprep.subr.bf16.mxu0 0
        %918 = vmatpush1.bf16.xpose.msra.mxu0 0
        %919 = vmatprep.subr.bf16.mxu0 0
        %920 = vmatpush1.bf16.xpose.msra.mxu0 0
        %921 = vmatprep.subr.bf16.mxu0 0
        %922 = vmatpush1.bf16.xpose.msra.mxu0 0
        %923 = vmatprep.subr.bf16.mxu0 0
        %924 = vmatpush1.bf16.xpose.msra.mxu0 0
        %925 = vmatprep.subr.bf16.mxu0 0
        %926 = vmatpush1.bf16.xpose.msra.mxu0 0
        %927 = vmatprep.subr.bf16.mxu0 0
        %928 = vmatpush1.bf16.xpose.msra.mxu0 0
        %929 = vmatprep.subr.bf16.mxu0 0
        %930 = vmatpush1.bf16.xpose.msra.mxu0 0
        %931 = vmatprep.subr.bf16.mxu0 0
        %932 = vmatpush1.bf16.xpose.msra.mxu0 0
        %933 = vmatprep.subr.bf16.mxu0 0
        %934 = vmatpush1.bf16.xpose.msra.mxu0 0
        %935 = vmatprep.mubr.bf16.mxu0 0
        %936 = vmatmul.mubr.bf16.gmra.mrb[0].mxu0 %v898
        %v937 = vpop.f32.mrb[0].mxu0
        %v938 = vadd.f32 0.0, %v937
        %v939 = vpop.f32.mrb[0].mxu0
        %v940 = vpop.f32.mrb[0].mxu0
        %v941 = vpop.f32.mrb[0].mxu0
        %942 = vdwg.mxu0
        %v943 = vsel %vm675, %v938, -inf
        %944 = vmax.xlane.f32.xlu0 %v943
        %v945 = vpop.xlane.xlu0 %944
        %v946 = vsub.f32 %v938, %v945
        %v947 = vmul.f32 %v946, 1.442695
        %v948 = vpow.pop %v947
        %v949 = vsel %vm675, %v948, 0.0
        %950 = vadd.xlane.f32.xlu0 %v949
        %v951 = vpop.xlane.xlu0 %950
        %v952 = vrcp.pop %v951
        %v953 = vmul.f32 %v948, %v952
        %v954 = vpack.c.bf16 %v953, %v953
        %955 = vrot.lane.b32.xlu0 %v671, 48
        %v956 = vpop.permute.xlu0 %955
        %v958 = vsel %vm675, %v954, 0
        %v961 = vsel %vm739, %v956, 0
        %963 = vmatprep.subr.bf16.mxu0 0
        %964 = vmatpush1.bf16.msra.mxu0 %v961
        %965 = vmatprep.subr.bf16.mxu0 0
        %966 = vmatpush1.bf16.msra.mxu0 0
        %967 = vmatprep.subr.bf16.mxu0 0
        %968 = vmatpush1.bf16.msra.mxu0 0
        %969 = vmatprep.subr.bf16.mxu0 0
        %970 = vmatpush1.bf16.msra.mxu0 0
        %971 = vmatprep.subr.bf16.mxu0 0
        %972 = vmatpush1.bf16.msra.mxu0 0
        %973 = vmatprep.subr.bf16.mxu0 0
        %974 = vmatpush1.bf16.msra.mxu0 0
        %975 = vmatprep.subr.bf16.mxu0 0
        %976 = vmatpush1.bf16.msra.mxu0 0
        %977 = vmatprep.subr.bf16.mxu0 0
        %978 = vmatpush1.bf16.msra.mxu0 0
        %979 = vmatprep.subr.bf16.mxu0 0
        %980 = vmatpush1.bf16.msra.mxu0 0
        %981 = vmatprep.subr.bf16.mxu0 0
        %982 = vmatpush1.bf16.msra.mxu0 0
        %983 = vmatprep.subr.bf16.mxu0 0
        %984 = vmatpush1.bf16.msra.mxu0 0
        %985 = vmatprep.subr.bf16.mxu0 0
        %986 = vmatpush1.bf16.msra.mxu0 0
        %987 = vmatprep.subr.bf16.mxu0 0
        %988 = vmatpush1.bf16.msra.mxu0 0
        %989 = vmatprep.subr.bf16.mxu0 0
        %990 = vmatpush1.bf16.msra.mxu0 0
        %991 = vmatprep.subr.bf16.mxu0 0
        %992 = vmatpush1.bf16.msra.mxu0 0
        %993 = vmatprep.subr.bf16.mxu0 0
        %994 = vmatpush1.bf16.msra.mxu0 0
        %995 = vmatprep.mubr.bf16.mxu0 0
        %996 = vmatmul.mubr.bf16.gmra.mrb[0].mxu0 %v958
        %v997 = vpop.f32.mrb[0].mxu0
        %v998 = vadd.f32 0.0, %v997
        %v999 = vpop.f32.mrb[0].mxu0
        %v1000 = vpop.f32.mrb[0].mxu0
        %v1001 = vpop.f32.mrb[0].mxu0
        %1002 = vdwg.mxu0
        %1003 = vrot.lane.b32.xlu0 %v671, 104
        %v1004 = vpop.permute.xlu0 %1003
        %1005 = vrot.lane.b32.xlu0 %v671, 72
        %v1006 = vpop.permute.xlu0 %1005
        %v1008 = vsel %vm675, %v1004, 0
        %v1011 = vsel %vm675, %v1006, 0
        %1013 = vmatprep.subr.bf16.mxu0 0
        %1014 = vmatpush1.bf16.xpose.msra.mxu0 %v1011
        %1015 = vmatprep.subr.bf16.mxu0 0
        %1016 = vmatpush1.bf16.xpose.msra.mxu0 0
        %1017 = vmatprep.subr.bf16.mxu0 0
        %1018 = vmatpush1.bf16.xpose.msra.mxu0 0
        %1019 = vmatprep.subr.bf16.mxu0 0
        %1020 = vmatpush1.bf16.xpose.msra.mxu0 0
        %1021 = vmatprep.subr.bf16.mxu0 0
        %1022 = vmatpush1.bf16.xpose.msra.mxu0 0
        %1023 = vmatprep.subr.bf16.mxu0 0
        %1024 = vmatpush1.bf16.xpose.msra.mxu0 0
        %1025 = vmatprep.subr.bf16.mxu0 0
        %1026 = vmatpush1.bf16.xpose.msra.mxu0 0
        %1027 = vmatprep.subr.bf16.mxu0 0
        %1028 = vmatpush1.bf16.xpose.msra.mxu0 0
        %1029 = vmatprep.subr.bf16.mxu0 0
        %1030 = vmatpush1.bf16.xpose.msra.mxu0 0
        %1031 = vmatprep.subr.bf16.mxu0 0
        %1032 = vmatpush1.bf16.xpose.msra.mxu0 0
        %1033 = vmatprep.subr.bf16.mxu0 0
        %1034 = vmatpush1.bf16.xpose.msra.mxu0 0
        %1035 = vmatprep.subr.bf16.mxu0 0
        %1036 = vmatpush1.bf16.xpose.msra.mxu0 0
        %1037 = vmatprep.subr.bf16.mxu0 0
        %1038 = vmatpush1.bf16.xpose.msra.mxu0 0
        %1039 = vmatprep.subr.bf16.mxu0 0
        %1040 = vmatpush1.bf16.xpose.msra.mxu0 0
        %1041 = vmatprep.subr.bf16.mxu0 0
        %1042 = vmatpush1.bf16.xpose.msra.mxu0 0
        %1043 = vmatprep.subr.bf16.mxu0 0
        %1044 = vmatpush1.bf16.xpose.msra.mxu0 0
        %1045 = vmatprep.mubr.bf16.mxu0 0
        %1046 = vmatmul.mubr.bf16.gmra.mrb[0].mxu0 %v1008
        %v1047 = vpop.f32.mrb[0].mxu0
        %v1048 = vadd.f32 0.0, %v1047
        %v1049 = vpop.f32.mrb[0].mxu0
        %v1050 = vpop.f32.mrb[0].mxu0
        %v1051 = vpop.f32.mrb[0].mxu0
        %1052 = vdwg.mxu0
        %v1053 = vsel %vm675, %v1048, -inf
        %1054 = vmax.xlane.f32.xlu0 %v1053
        %v1055 = vpop.xlane.xlu0 %1054
        %v1056 = vsub.f32 %v1048, %v1055
        %v1057 = vmul.f32 %v1056, 1.442695
        %v1058 = vpow.pop %v1057
        %v1059 = vsel %vm675, %v1058, 0.0
        %1060 = vadd.xlane.f32.xlu0 %v1059
        %v1061 = vpop.xlane.xlu0 %1060
        %v1062 = vrcp.pop %v1061
        %v1063 = vmul.f32 %v1058, %v1062
        %v1064 = vpack.c.bf16 %v1063, %v1063
        %1065 = vrot.lane.b32.xlu0 %v671, 40
        %v1066 = vpop.permute.xlu0 %1065
        %v1068 = vsel %vm675, %v1064, 0
        %v1071 = vsel %vm739, %v1066, 0
        %1073 = vmatprep.subr.bf16.mxu0 0
        %1074 = vmatpush1.bf16.msra.mxu0 %v1071
        %1075 = vmatprep.subr.bf16.mxu0 0
        %1076 = vmatpush1.bf16.msra.mxu0 0
        %1077 = vmatprep.subr.bf16.mxu0 0
        %1078 = vmatpush1.bf16.msra.mxu0 0
        %1079 = vmatprep.subr.bf16.mxu0 0
        %1080 = vmatpush1.bf16.msra.mxu0 0
        %1081 = vmatprep.subr.bf16.mxu0 0
        %1082 = vmatpush1.bf16.msra.mxu0 0
        %1083 = vmatprep.subr.bf16.mxu0 0
        %1084 = vmatpush1.bf16.msra.mxu0 0
        %1085 = vmatprep.subr.bf16.mxu0 0
        %1086 = vmatpush1.bf16.msra.mxu0 0
        %1087 = vmatprep.subr.bf16.mxu0 0
        %1088 = vmatpush1.bf16.msra.mxu0 0
        %1089 = vmatprep.subr.bf16.mxu0 0
        %1090 = vmatpush1.bf16.msra.mxu0 0
        %1091 = vmatprep.subr.bf16.mxu0 0
        %1092 = vmatpush1.bf16.msra.mxu0 0
        %1093 = vmatprep.subr.bf16.mxu0 0
        %1094 = vmatpush1.bf16.msra.mxu0 0
        %1095 = vmatprep.subr.bf16.mxu0 0
        %1096 = vmatpush1.bf16.msra.mxu0 0
        %1097 = vmatprep.subr.bf16.mxu0 0
        %1098 = vmatpush1.bf16.msra.mxu0 0
        %1099 = vmatprep.subr.bf16.mxu0 0
        %1100 = vmatpush1.bf16.msra.mxu0 0
        %1101 = vmatprep.subr.bf16.mxu0 0
        %1102 = vmatpush1.bf16.msra.mxu0 0
        %1103 = vmatprep.subr.bf16.mxu0 0
        %1104 = vmatpush1.bf16.msra.mxu0 0
        %1105 = vmatprep.mubr.bf16.mxu0 0
        %1106 = vmatmul.mubr.bf16.gmra.mrb[0].mxu0 %v1068
        %v1107 = vpop.f32.mrb[0].mxu0
        %v1108 = vadd.f32 0.0, %v1107
        %v1109 = vpop.f32.mrb[0].mxu0
        %v1110 = vpop.f32.mrb[0].mxu0
        %v1111 = vpop.f32.mrb[0].mxu0
        %1112 = vdwg.mxu0
        %1114 = vrot.lane.b32.xlu0 %v888, 8
        %v1115 = vpop.permute.xlu0 %1114
        %1118 = vrot.lane.b32.xlu0 %v998, 16
        %v1119 = vpop.permute.xlu0 %1118
        %1122 = vrot.lane.b32.xlu0 %v1108, 24
        %v1123 = vpop.permute.xlu0 %1122
        %v1125 = vsel %vm675, %v778, %v1115
        %vm1126 = vcmask 130048
        %v1127 = vsel %vm1126, %v1125, %v1119
        %vm1128 = vcmask 195584
        %v1129 = vsel %vm1128, %v1127, %v1123
        %v1130 = vpack.c.bf16 %v1129, %v1129
        %v1131 = vld [vmem:[%s490] sm:$0xf]
        %v1132 = vld [vmem:[%s490 + $0x4] sm:$0xf]
        %v1133 = vld [vmem:[%s490 + $0x8] sm:$0xf]
        %v1134 = vld [vmem:[%s490 + $0xc] sm:$0xf]
        %v1135 = vlaneseq
        %v1136 = vshrl.u32 %v1135, 7
        %v1137 = vsub.s32 0, %v1136
        %v1138 = vrot.slane %v603, %v1137
        %v1143 = vunpack.c.l.b16 %v1131
        %v1144 = vunpack.c.l.b16 %v1132
        %v1145 = vunpack.c.l.b16 %v1133
        %v1146 = vunpack.c.l.b16 %v1134
        %v1147 = vpack.c.b16 %v1144, %v1143
        %v1148 = vpack.c.b16 %v1146, %v1145
        %v1152 = vsel %vm627, %v1130, 0
        %1154 = vmatprep.subr.bf16.mxu0 0
        %1155 = vmatpush1.bf16.msra.mxu0 %v1147
        %1156 = vmatprep.subr.bf16.mxu0 0
        %1157 = vmatpush1.bf16.msra.mxu0 %v1148
        %1158 = vmatprep.subr.bf16.mxu0 0
        %1159 = vmatpush1.bf16.msra.mxu0 0
        %1160 = vmatprep.subr.bf16.mxu0 0
        %1161 = vmatpush1.bf16.msra.mxu0 0
        %1162 = vmatprep.subr.bf16.mxu0 0
        %1163 = vmatpush1.bf16.msra.mxu0 0
        %1164 = vmatprep.subr.bf16.mxu0 0
        %1165 = vmatpush1.bf16.msra.mxu0 0
        %1166 = vmatprep.subr.bf16.mxu0 0
        %1167 = vmatpush1.bf16.msra.mxu0 0
        %1168 = vmatprep.subr.bf16.mxu0 0
        %1169 = vmatpush1.bf16.msra.mxu0 0
        %1170 = vmatprep.subr.bf16.mxu0 0
        %1171 = vmatpush1.bf16.msra.mxu0 0
        %1172 = vmatprep.subr.bf16.mxu0 0
        %1173 = vmatpush1.bf16.msra.mxu0 0
        %1174 = vmatprep.subr.bf16.mxu0 0
        %1175 = vmatpush1.bf16.msra.mxu0 0
        %1176 = vmatprep.subr.bf16.mxu0 0
        %1177 = vmatpush1.bf16.msra.mxu0 0
        %1178 = vmatprep.subr.bf16.mxu0 0
        %1179 = vmatpush1.bf16.msra.mxu0 0
        %1180 = vmatprep.subr.bf16.mxu0 0
        %1181 = vmatpush1.bf16.msra.mxu0 0
        %1182 = vmatprep.subr.bf16.mxu0 0
        %1183 = vmatpush1.bf16.msra.mxu0 0
        %1184 = vmatprep.subr.bf16.mxu0 0
        %1185 = vmatpush1.bf16.msra.mxu0 0
        %1186 = vmatprep.mubr.bf16.mxu0 0
        %1187 = vmatmul.mubr.bf16.gmra.mrb[0].mxu0 %v1152
        %v1188 = vpop.f32.mrb[0].mxu0
        %v1189 = vadd.f32 %v1138, %v1188
        %v1190 = vpop.f32.mrb[0].mxu0
        %v1191 = vpop.f32.mrb[0].mxu0
        %v1192 = vpop.f32.mrb[0].mxu0
        %1193 = vdwg.mxu0
        %v1194 = vadd.f32 %v601, %v1189
        %v1195 = vsel %vm627, %v1194, 0.0
        %1196 = vadd.xlane.f32.xlu0 %v1195
        %v1197 = vpop.xlane.xlu0 %1196
        %v1198 = vrcp.pop 32.0
        %v1199 = vmul.f32 %v1197, %v1198
        %v1200 = vsub.f32 %v1194, %v1199
        %v1201 = vmul.f32 %v1200, %v1200
        %v1202 = vsel %vm627, %v1201, 0.0
        %1203 = vadd.xlane.f32.xlu0 %v1202
        %v1204 = vpop.xlane.xlu0 %1203
        %v1205 = vmul.f32 %v1204, %v1198
        %v1206 = vadd.f32 %v1205, 1e-05
        %v1207 = vrsqrt.pop %v1206
        %v1208 = vmul.f32 %v1200, %v1207
        %v1209 = vlaneseq
        %v1210 = vshrl.u32 %v1209, 7
        %v1211 = vsub.s32 2, %v1210
        %v1212 = vrot.slane %v603, %v1211
        %v1213 = vmul.f32 %v1208, %v1212
        %v1214 = vlaneseq
        %v1215 = vshrl.u32 %v1214, 7
        %v1216 = vsub.s32 3, %v1215
        %v1217 = vrot.slane %v603, %v1216
        %v1218 = vadd.f32 %v1213, %v1217
        %v1219 = vpack.c.bf16 %v1218, %v1218
        %v1220 = vld [vmem:[%s499] sm:$0xff]
        %v1221 = vld [vmem:[%s499 + $0x8] sm:$0xff]
        %v1222 = vld [vmem:[%s499 + $0x10] sm:$0xff]
        %v1223 = vld [vmem:[%s499 + $0x18] sm:$0xff]
        %v1224 = vld [vmem:[%s499 + $0x20] sm:$0xff]
        %v1225 = vld [vmem:[%s499 + $0x28] sm:$0xff]
        %v1226 = vld [vmem:[%s499 + $0x30] sm:$0xff]
        %v1227 = vld [vmem:[%s499 + $0x38] sm:$0xff]
        %v1228 = vld [vmem:[%s508] sm:$0xf]
        %v1230 = vlaneseq
        %v1231 = vshrl.u32 %v1230, 7
        %v1232 = vsub.s32 0, %v1231
        %v1233 = vrot.slane %v1228, %v1232
        %v1234 = vlaneseq
        %v1235 = vshrl.u32 %v1234, 7
        %v1236 = vsub.s32 1, %v1235
        %v1237 = vrot.slane %v1228, %v1236
        %v1238 = vlaneseq
        %v1239 = vshrl.u32 %v1238, 7
        %v1240 = vsub.s32 2, %v1239
        %v1241 = vrot.slane %v1228, %v1240
        %v1242 = vlaneseq
        %v1243 = vshrl.u32 %v1242, 7
        %v1244 = vsub.s32 3, %v1243
        %v1245 = vrot.slane %v1228, %v1244
        %v1258 = vunpack.c.l.b16 %v1220
        %v1259 = vunpack.c.h.b16 %v1220
        %v1260 = vunpack.c.l.b16 %v1221
        %v1261 = vunpack.c.h.b16 %v1221
        %v1262 = vunpack.c.l.b16 %v1222
        %v1263 = vunpack.c.h.b16 %v1222
        %v1264 = vunpack.c.l.b16 %v1223
        %v1265 = vunpack.c.h.b16 %v1223
        %v1266 = vunpack.c.l.b16 %v1224
        %v1267 = vunpack.c.h.b16 %v1224
        %v1268 = vunpack.c.l.b16 %v1225
        %v1269 = vunpack.c.h.b16 %v1225
        %v1270 = vunpack.c.l.b16 %v1226
        %v1271 = vunpack.c.h.b16 %v1226
        %v1272 = vunpack.c.l.b16 %v1227
        %v1273 = vunpack.c.h.b16 %v1227
        %v1274 = vpack.c.b16 %v1262, %v1258
        %v1275 = vpack.c.b16 %v1263, %v1259
        %v1276 = vpack.c.b16 %v1264, %v1260
        %v1277 = vpack.c.b16 %v1265, %v1261
        %v1278 = vpack.c.b16 %v1270, %v1266
        %v1279 = vpack.c.b16 %v1271, %v1267
        %v1280 = vpack.c.b16 %v1272, %v1268
        %v1281 = vpack.c.b16 %v1273, %v1269
        %v1291 = vsel %vm627, %v1219, 0
        %1293 = vmatprep.subr.bf16.mxu0 %v1275
        %1294 = vmatpush1.bf16.msra.mxu0 %v1274
        %1295 = vmatprep.subr.bf16.mxu0 %v1279
        %1296 = vmatpush1.bf16.msra.mxu0 %v1278
        %1297 = vmatprep.subr.bf16.mxu0 0
        %1298 = vmatpush1.bf16.msra.mxu0 0
        %1299 = vmatprep.subr.bf16.mxu0 0
        %1300 = vmatpush1.bf16.msra.mxu0 0
        %1301 = vmatprep.subr.bf16.mxu0 0
        %1302 = vmatpush1.bf16.msra.mxu0 0
        %1303 = vmatprep.subr.bf16.mxu0 0
        %1304 = vmatpush1.bf16.msra.mxu0 0
        %1305 = vmatprep.subr.bf16.mxu0 0
        %1306 = vmatpush1.bf16.msra.mxu0 0
        %1307 = vmatprep.subr.bf16.mxu0 0
        %1308 = vmatpush1.bf16.msra.mxu0 0
        %1309 = vmatprep.subr.bf16.mxu0 0
        %1310 = vmatpush1.bf16.msra.mxu0 0
        %1311 = vmatprep.subr.bf16.mxu0 0
        %1312 = vmatpush1.bf16.msra.mxu0 0
        %1313 = vmatprep.subr.bf16.mxu0 0
        %1314 = vmatpush1.bf16.msra.mxu0 0
        %1315 = vmatprep.subr.bf16.mxu0 0
        %1316 = vmatpush1.bf16.msra.mxu0 0
        %1317 = vmatprep.subr.bf16.mxu0 0
        %1318 = vmatpush1.bf16.msra.mxu0 0
        %1319 = vmatprep.subr.bf16.mxu0 0
        %1320 = vmatpush1.bf16.msra.mxu0 0
        %1321 = vmatprep.subr.bf16.mxu0 0
        %1322 = vmatpush1.bf16.msra.mxu0 0
        %1323 = vmatprep.subr.bf16.mxu0 0
        %1324 = vmatpush1.bf16.msra.mxu0 0
        %1325 = vmatprep.mubr.bf16.mxu0 0
        %1326 = vmatmul.mubr.bf16.gmra.mrb[0].mxu0 %v1291
        %v1327 = vpop.f32.mrb[0].mxu0
        %v1328 = vadd.f32 %v1233, %v1327
        %v1329 = vpop.f32.mrb[0].mxu0
        %v1330 = vadd.f32 %v1237, %v1329
        %v1331 = vpop.f32.mrb[0].mxu0
        %v1332 = vpop.f32.mrb[0].mxu0
        %1333 = vdwg.mxu0
        %1334 = vmatprep.subr.bf16.mxu0 %v1277
        %1335 = vmatpush1.bf16.msra.mxu0 %v1276
        %1336 = vmatprep.subr.bf16.mxu0 %v1281
        %1337 = vmatpush1.bf16.msra.mxu0 %v1280
        %1338 = vmatprep.subr.bf16.mxu0 0
        %1339 = vmatpush1.bf16.msra.mxu0 0
        %1340 = vmatprep.subr.bf16.mxu0 0
        %1341 = vmatpush1.bf16.msra.mxu0 0
        %1342 = vmatprep.subr.bf16.mxu0 0
        %1343 = vmatpush1.bf16.msra.mxu0 0
        %1344 = vmatprep.subr.bf16.mxu0 0
        %1345 = vmatpush1.bf16.msra.mxu0 0
        %1346 = vmatprep.subr.bf16.mxu0 0
        %1347 = vmatpush1.bf16.msra.mxu0 0
        %1348 = vmatprep.subr.bf16.mxu0 0
        %1349 = vmatpush1.bf16.msra.mxu0 0
        %1350 = vmatprep.subr.bf16.mxu0 0
        %1351 = vmatpush1.bf16.msra.mxu0 0
        %1352 = vmatprep.subr.bf16.mxu0 0
        %1353 = vmatpush1.bf16.msra.mxu0 0
        %1354 = vmatprep.subr.bf16.mxu0 0
        %1355 = vmatpush1.bf16.msra.mxu0 0
        %1356 = vmatprep.subr.bf16.mxu0 0
        %1357 = vmatpush1.bf16.msra.mxu0 0
        %1358 = vmatprep.subr.bf16.mxu0 0
        %1359 = vmatpush1.bf16.msra.mxu0 0
        %1360 = vmatprep.subr.bf16.mxu0 0
        %1361 = vmatpush1.bf16.msra.mxu0 0
        %1362 = vmatprep.subr.bf16.mxu0 0
        %1363 = vmatpush1.bf16.msra.mxu0 0
        %1364 = vmatprep.subr.bf16.mxu0 0
        %1365 = vmatpush1.bf16.msra.mxu0 0
        %1366 = vmatprep.mubr.bf16.mxu0 0
        %1367 = vmatmul.mubr.bf16.gmra.mrb[0].mxu0 %v1291
        %v1368 = vpop.f32.mrb[0].mxu0
        %v1369 = vadd.f32 %v1241, %v1368
        %v1370 = vpop.f32.mrb[0].mxu0
        %v1371 = vadd.f32 %v1245, %v1370
        %v1372 = vpop.f32.mrb[0].mxu0
        %v1373 = vpop.f32.mrb[0].mxu0
        %1374 = vdwg.mxu0
        %v1375 = vmax.f32 %v1328, 0.0
        %v1376 = vmax.f32 %v1330, 0.0
        %v1377 = vmax.f32 %v1369, 0.0
        %v1378 = vmax.f32 %v1371, 0.0
        %v1379 = vpack.c.bf16 %v1375, %v1375
        %v1380 = vpack.c.bf16 %v1376, %v1376
        %v1381 = vpack.c.bf16 %v1377, %v1377
        %v1382 = vpack.c.bf16 %v1378, %v1378
        %v1383 = vld [vmem:[%s517] sm:$0xf]
        %v1384 = vld [vmem:[%s517 + $0x4] sm:$0xf]
        %v1385 = vld [vmem:[%s517 + $0x8] sm:$0xf]
        %v1386 = vld [vmem:[%s517 + $0xc] sm:$0xf]
        %v1387 = vld [vmem:[%s517 + $0x10] sm:$0xf]
        %v1388 = vld [vmem:[%s517 + $0x14] sm:$0xf]
        %v1389 = vld [vmem:[%s517 + $0x18] sm:$0xf]
        %v1390 = vld [vmem:[%s517 + $0x1c] sm:$0xf]
        %v1391 = vld [vmem:[%s517 + $0x20] sm:$0xf]
        %v1392 = vld [vmem:[%s517 + $0x24] sm:$0xf]
        %v1393 = vld [vmem:[%s517 + $0x28] sm:$0xf]
        %v1394 = vld [vmem:[%s517 + $0x2c] sm:$0xf]
        %v1395 = vld [vmem:[%s517 + $0x30] sm:$0xf]
        %v1396 = vld [vmem:[%s517 + $0x34] sm:$0xf]
        %v1397 = vld [vmem:[%s517 + $0x38] sm:$0xf]
        %v1398 = vld [vmem:[%s517 + $0x3c] sm:$0xf]
        %v1399 = vld [vmem:[%s517 + $0x40] sm:$0xf]
        %v1400 = vld [vmem:[%s517 + $0x44] sm:$0xf]
        %v1401 = vld [vmem:[%s517 + $0x48] sm:$0xf]
        %v1402 = vld [vmem:[%s517 + $0x4c] sm:$0xf]
        %v1403 = vld [vmem:[%s517 + $0x50] sm:$0xf]
        %v1404 = vld [vmem:[%s517 + $0x54] sm:$0xf]
        %v1405 = vld [vmem:[%s517 + $0x58] sm:$0xf]
        %v1406 = vld [vmem:[%s517 + $0x5c] sm:$0xf]
        %v1407 = vld [vmem:[%s517 + $0x60] sm:$0xf]
        %v1408 = vld [vmem:[%s517 + $0x64] sm:$0xf]
        %v1409 = vld [vmem:[%s517 + $0x68] sm:$0xf]
        %v1410 = vld [vmem:[%s517 + $0x6c] sm:$0xf]
        %v1411 = vld [vmem:[%s517 + $0x70] sm:$0xf]
        %v1412 = vld [vmem:[%s517 + $0x74] sm:$0xf]
        %v1413 = vld [vmem:[%s517 + $0x78] sm:$0xf]
        %v1414 = vld [vmem:[%s517 + $0x7c] sm:$0xf]
        %v1415 = vld [vmem:[%s517 + $0x80] sm:$0xf]
        %v1416 = vld [vmem:[%s517 + $0x84] sm:$0xf]
        %v1417 = vld [vmem:[%s517 + $0x88] sm:$0xf]
        %v1418 = vld [vmem:[%s517 + $0x8c] sm:$0xf]
        %v1419 = vld [vmem:[%s517 + $0x90] sm:$0xf]
        %v1420 = vld [vmem:[%s517 + $0x94] sm:$0xf]
        %v1421 = vld [vmem:[%s517 + $0x98] sm:$0xf]
        %v1422 = vld [vmem:[%s517 + $0x9c] sm:$0xf]
        %v1423 = vld [vmem:[%s517 + $0xa0] sm:$0xf]
        %v1424 = vld [vmem:[%s517 + $0xa4] sm:$0xf]
        %v1425 = vld [vmem:[%s517 + $0xa8] sm:$0xf]
        %v1426 = vld [vmem:[%s517 + $0xac] sm:$0xf]
        %v1427 = vld [vmem:[%s517 + $0xb0] sm:$0xf]
        %v1428 = vld [vmem:[%s517 + $0xb4] sm:$0xf]
        %v1429 = vld [vmem:[%s517 + $0xb8] sm:$0xf]
        %v1430 = vld [vmem:[%s517 + $0xbc] sm:$0xf]
        %v1431 = vld [vmem:[%s517 + $0xc0] sm:$0xf]
        %v1432 = vld [vmem:[%s517 + $0xc4] sm:$0xf]
        %v1433 = vld [vmem:[%s517 + $0xc8] sm:$0xf]
        %v1434 = vld [vmem:[%s517 + $0xcc] sm:$0xf]
        %v1435 = vld [vmem:[%s517 + $0xd0] sm:$0xf]
        %v1436 = vld [vmem:[%s517 + $0xd4] sm:$0xf]
        %v1437 = vld [vmem:[%s517 + $0xd8] sm:$0xf]
        %v1438 = vld [vmem:[%s517 + $0xdc] sm:$0xf]
        %v1439 = vld [vmem:[%s517 + $0xe0] sm:$0xf]
        %v1440 = vld [vmem:[%s517 + $0xe4] sm:$0xf]
        %v1441 = vld [vmem:[%s517 + $0xe8] sm:$0xf]
        %v1442 = vld [vmem:[%s517 + $0xec] sm:$0xf]
        %v1443 = vld [vmem:[%s517 + $0xf0] sm:$0xf]
        %v1444 = vld [vmem:[%s517 + $0xf4] sm:$0xf]
        %v1445 = vld [vmem:[%s517 + $0xf8] sm:$0xf]
        %v1446 = vld [vmem:[%s517 + $0xfc] sm:$0xf]
        %v1447 = vlaneseq
        %v1448 = vshrl.u32 %v1447, 7
        %v1449 = vsub.s32 1, %v1448
        %v1450 = vrot.slane %v603, %v1449
        %v1515 = vunpack.c.l.b16 %v1383
        %v1516 = vunpack.c.l.b16 %v1384
        %v1517 = vunpack.c.l.b16 %v1385
        %v1518 = vunpack.c.l.b16 %v1386
        %v1519 = vunpack.c.l.b16 %v1387
        %v1520 = vunpack.c.l.b16 %v1388
        %v1521 = vunpack.c.l.b16 %v1389
        %v1522 = vunpack.c.l.b16 %v1390
        %v1523 = vunpack.c.l.b16 %v1391
        %v1524 = vunpack.c.l.b16 %v1392
        %v1525 = vunpack.c.l.b16 %v1393
        %v1526 = vunpack.c.l.b16 %v1394
        %v1527 = vunpack.c.l.b16 %v1395
        %v1528 = vunpack.c.l.b16 %v1396
        %v1529 = vunpack.c.l.b16 %v1397
        %v1530 = vunpack.c.l.b16 %v1398
        %v1531 = vunpack.c.l.b16 %v1399
        %v1532 = vunpack.c.l.b16 %v1400
        %v1533 = vunpack.c.l.b16 %v1401
        %v1534 = vunpack.c.l.b16 %v1402
        %v1535 = vunpack.c.l.b16 %v1403
        %v1536 = vunpack.c.l.b16 %v1404
        %v1537 = vunpack.c.l.b16 %v1405
        %v1538 = vunpack.c.l.b16 %v1406
        %v1539 = vunpack.c.l.b16 %v1407
        %v1540 = vunpack.c.l.b16 %v1408
        %v1541 = vunpack.c.l.b16 %v1409
        %v1542 = vunpack.c.l.b16 %v1410
        %v1543 = vunpack.c.l.b16 %v1411
        %v1544 = vunpack.c.l.b16 %v1412
        %v1545 = vunpack.c.l.b16 %v1413
        %v1546 = vunpack.c.l.b16 %v1414
        %v1547 = vunpack.c.l.b16 %v1415
        %v1548 = vunpack.c.l.b16 %v1416
        %v1549 = vunpack.c.l.b16 %v1417
        %v1550 = vunpack.c.l.b16 %v1418
        %v1551 = vunpack.c.l.b16 %v1419
        %v1552 = vunpack.c.l.b16 %v1420
        %v1553 = vunpack.c.l.b16 %v1421
        %v1554 = vunpack.c.l.b16 %v1422
        %v1555 = vunpack.c.l.b16 %v1423
        %v1556 = vunpack.c.l.b16 %v1424
        %v1557 = vunpack.c.l.b16 %v1425
        %v1558 = vunpack.c.l.b16 %v1426
        %v1559 = vunpack.c.l.b16 %v1427
        %v1560 = vunpack.c.l.b16 %v1428
        %v1561 = vunpack.c.l.b16 %v1429
        %v1562 = vunpack.c.l.b16 %v1430
        %v1563 = vunpack.c.l.b16 %v1431
        %v1564 = vunpack.c.l.b16 %v1432
        %v1565 = vunpack.c.l.b16 %v1433
        %v1566 = vunpack.c.l.b16 %v1434
        %v1567 = vunpack.c.l.b16 %v1435
        %v1568 = vunpack.c.l.b16 %v1436
        %v1569 = vunpack.c.l.b16 %v1437
        %v1570 = vunpack.c.l.b16 %v1438
        %v1571 = vunpack.c.l.b16 %v1439
        %v1572 = vunpack.c.l.b16 %v1440
        %v1573 = vunpack.c.l.b16 %v1441
        %v1574 = vunpack.c.l.b16 %v1442
        %v1575 = vunpack.c.l.b16 %v1443
        %v1576 = vunpack.c.l.b16 %v1444
        %v1577 = vunpack.c.l.b16 %v1445
        %v1578 = vunpack.c.l.b16 %v1446
        %v1579 = vpack.c.b16 %v1516, %v1515
        %v1580 = vpack.c.b16 %v1518, %v1517
        %v1581 = vpack.c.b16 %v1520, %v1519
        %v1582 = vpack.c.b16 %v1522, %v1521
        %v1583 = vpack.c.b16 %v1524, %v1523
        %v1584 = vpack.c.b16 %v1526, %v1525
        %v1585 = vpack.c.b16 %v1528, %v1527
        %v1586 = vpack.c.b16 %v1530, %v1529
        %v1587 = vpack.c.b16 %v1532, %v1531
        %v1588 = vpack.c.b16 %v1534, %v1533
        %v1589 = vpack.c.b16 %v1536, %v1535
        %v1590 = vpack.c.b16 %v1538, %v1537
        %v1591 = vpack.c.b16 %v1540, %v1539
        %v1592 = vpack.c.b16 %v1542, %v1541
        %v1593 = vpack.c.b16 %v1544, %v1543
        %v1594 = vpack.c.b16 %v1546, %v1545
        %v1595 = vpack.c.b16 %v1548, %v1547
        %v1596 = vpack.c.b16 %v1550, %v1549
        %v1597 = vpack.c.b16 %v1552, %v1551
        %v1598 = vpack.c.b16 %v1554, %v1553
        %v1599 = vpack.c.b16 %v1556, %v1555
        %v1600 = vpack.c.b16 %v1558, %v1557
        %v1601 = vpack.c.b16 %v1560, %v1559
        %v1602 = vpack.c.b16 %v1562, %v1561
        %v1603 = vpack.c.b16 %v1564, %v1563
        %v1604 = vpack.c.b16 %v1566, %v1565
        %v1605 = vpack.c.b16 %v1568, %v1567
        %v1606 = vpack.c.b16 %v1570, %v1569
        %v1607 = vpack.c.b16 %v1572, %v1571
        %v1608 = vpack.c.b16 %v1574, %v1573
        %v1609 = vpack.c.b16 %v1576, %v1575
        %v1610 = vpack.c.b16 %v1578, %v1577
        %1643 = vmatprep.subr.bf16.mxu0 0
        %1644 = vmatpush1.bf16.msra.mxu0 %v1579
        %1645 = vmatprep.subr.bf16.mxu0 0
        %1646 = vmatpush1.bf16.msra.mxu0 %v1580
        %1647 = vmatprep.subr.bf16.mxu0 0
        %1648 = vmatpush1.bf16.msra.mxu0 %v1581
        %1649 = vmatprep.subr.bf16.mxu0 0
        %1650 = vmatpush1.bf16.msra.mxu0 %v1582
        %1651 = vmatprep.subr.bf16.mxu0 0
        %1652 = vmatpush1.bf16.msra.mxu0 %v1583
        %1653 = vmatprep.subr.bf16.mxu0 0
        %1654 = vmatpush1.bf16.msra.mxu0 %v1584
        %1655 = vmatprep.subr.bf16.mxu0 0
        %1656 = vmatpush1.bf16.msra.mxu0 %v1585
        %1657 = vmatprep.subr.bf16.mxu0 0
        %1658 = vmatpush1.bf16.msra.mxu0 %v1586
        %1659 = vmatprep.subr.bf16.mxu0 0
        %1660 = vmatpush1.bf16.msra.mxu0 %v1587
        %1661 = vmatprep.subr.bf16.mxu0 0
        %1662 = vmatpush1.bf16.msra.mxu0 %v1588
        %1663 = vmatprep.subr.bf16.mxu0 0
        %1664 = vmatpush1.bf16.msra.mxu0 %v1589
        %1665 = vmatprep.subr.bf16.mxu0 0
        %1666 = vmatpush1.bf16.msra.mxu0 %v1590
        %1667 = vmatprep.subr.bf16.mxu0 0
        %1668 = vmatpush1.bf16.msra.mxu0 %v1591
        %1669 = vmatprep.subr.bf16.mxu0 0
        %1670 = vmatpush1.bf16.msra.mxu0 %v1592
        %1671 = vmatprep.subr.bf16.mxu0 0
        %1672 = vmatpush1.bf16.msra.mxu0 %v1593
        %1673 = vmatprep.subr.bf16.mxu0 0
        %1674 = vmatpush1.bf16.msra.mxu0 %v1594
        %1675 = vmatprep.mubr.bf16.mxu0 %v1380
        %1676 = vmatmul.mubr.bf16.gmra.mrb[0].mxu0 %v1379
        %v1677 = vpop.f32.mrb[0].mxu0
        %v1678 = vadd.f32 %v1450, %v1677
        %v1679 = vpop.f32.mrb[0].mxu0
        %v1680 = vpop.f32.mrb[0].mxu0
        %v1681 = vpop.f32.mrb[0].mxu0
        %1682 = vdwg.mxu0
        %1683 = vmatprep.subr.bf16.mxu0 0
        %1684 = vmatpush1.bf16.msra.mxu0 %v1595
        %1685 = vmatprep.subr.bf16.mxu0 0
        %1686 = vmatpush1.bf16.msra.mxu0 %v1596
        %1687 = vmatprep.subr.bf16.mxu0 0
        %1688 = vmatpush1.bf16.msra.mxu0 %v1597
        %1689 = vmatprep.subr.bf16.mxu0 0
        %1690 = vmatpush1.bf16.msra.mxu0 %v1598
        %1691 = vmatprep.subr.bf16.mxu0 0
        %1692 = vmatpush1.bf16.msra.mxu0 %v1599
        %1693 = vmatprep.subr.bf16.mxu0 0
        %1694 = vmatpush1.bf16.msra.mxu0 %v1600
        %1695 = vmatprep.subr.bf16.mxu0 0
        %1696 = vmatpush1.bf16.msra.mxu0 %v1601
        %1697 = vmatprep.subr.bf16.mxu0 0
        %1698 = vmatpush1.bf16.msra.mxu0 %v1602
        %1699 = vmatprep.subr.bf16.mxu0 0
        %1700 = vmatpush1.bf16.msra.mxu0 %v1603
        %1701 = vmatprep.subr.bf16.mxu0 0
        %1702 = vmatpush1.bf16.msra.mxu0 %v1604
        %1703 = vmatprep.subr.bf16.mxu0 0
        %1704 = vmatpush1.bf16.msra.mxu0 %v1605
        %1705 = vmatprep.subr.bf16.mxu0 0
        %1706 = vmatpush1.bf16.msra.mxu0 %v1606
        %1707 = vmatprep.subr.bf16.mxu0 0
        %1708 = vmatpush1.bf16.msra.mxu0 %v1607
        %1709 = vmatprep.subr.bf16.mxu0 0
        %1710 = vmatpush1.bf16.msra.mxu0 %v1608
        %1711 = vmatprep.subr.bf16.mxu0 0
        %1712 = vmatpush1.bf16.msra.mxu0 %v1609
        %1713 = vmatprep.subr.bf16.mxu0 0
        %1714 = vmatpush1.bf16.msra.mxu0 %v1610
        %1715 = vmatprep.mubr.bf16.mxu0 %v1382
        %1716 = vmatmul.mubr.bf16.gmra.mrb[0].mxu0 %v1381
        %v1717 = vpop.f32.mrb[0].mxu0
        %v1718 = vadd.f32 %v1678, %v1717
        %v1719 = vpop.f32.mrb[0].mxu0
        %v1720 = vpop.f32.mrb[0].mxu0
        %v1721 = vpop.f32.mrb[0].mxu0
        %1722 = vdwg.mxu0
        %v1723 = vadd.f32 %v1218, %v1718
        %v1724 = vsel %vm627, %v1723, 0.0
        %1725 = vadd.xlane.f32.xlu0 %v1724
        %v1726 = vpop.xlane.xlu0 %1725
        %v1727 = vmul.f32 %v1726, %v1198
        %v1728 = vsub.f32 %v1723, %v1727
        %v1729 = vmul.f32 %v1728, %v1728
        %v1730 = vsel %vm627, %v1729, 0.0
        %1731 = vadd.xlane.f32.xlu0 %v1730
        %v1732 = vpop.xlane.xlu0 %1731
        %v1733 = vmul.f32 %v1732, %v1198
        %v1734 = vadd.f32 %v1733, 1e-05
        %v1735 = vrsqrt.pop %v1734
        %v1736 = vmul.f32 %v1728, %v1735
        %v1737 = vlaneseq
        %v1738 = vshrl.u32 %v1737, 7
        %v1739 = vsub.s32 4, %v1738
        %v1740 = vrot.slane %v603, %v1739
        %v1741 = vmul.f32 %v1736, %v1740
        %v1742 = vlaneseq
        %v1743 = vshrl.u32 %v1742, 7
        %v1744 = vsub.s32 5, %v1743
        %v1745 = vrot.slane %v603, %v1744
        %v1746 = vadd.f32 %v1741, %v1745
        %1747 = vst.msk [vmem:[%s592] sm:$0xff] %vm627, %v1746
        %s1748 = sand.u32 %s265, 1
        %s1749 = scalar_lea.sflag [#allocation4], %s1748
        %s1750 = sand.u32 %s265, 1
        %s1751 = smul.addr %s1750, 8
        %s1752 = scalar_lea.vmem [#allocation16], %s1751
        // Predicated region
        $region89: #{tpu_custom_call.1} parent=51 // pred_check
          %p1753 = pneg %p275
        $region90: #{tpu_custom_call.1} parent=51 // pred_check_branch
          %1755 = sbr.rel (%p1753) target = $region92
        $region91: #{tpu_custom_call.1} parent=51 // pred_region
          %s1757 = ssub.s32 128, 128
          %1758 = vsyncadd %s1749, %s1757
          %s1759 = smul.addr %s41, 128
          %s1760 = scalar_lea.hbm %s8, %s1759
          %s1762 = sshll.u32 %s1752, 4
          %s1763 = int_to_ptr.vmem [resolvable:$true] %s1762
          %1765 = dma.vmem_to_hbm [thread:$0]  %s1763, 128, %s1760, %s1749
        $region92: #{tpu_custom_call.1} parent=51 // pred_fallthru
          _
      $region52: #{tpu_custom_call.1} parent=5 // pred_fallthru
        _
      %p1766 = scmp.le.s32.totalorder 2, %s32
      // Predicated region
      $region93: #{tpu_custom_call.1} parent=5 // pred_check
        %p1767 = pneg %p1766
      $region94: #{tpu_custom_call.1} parent=5 // pred_check_branch
        %1769 = sbr.rel (%p1767) target = $region96
      $region95: #{tpu_custom_call.1} parent=5 // pred_region
        %s1770 = ssub.s32 %s32, 2
        // Predicated region
        $region97: #{tpu_custom_call.1} parent=95 // pred_check
          %p1771 = pneg %p281
        $region98: #{tpu_custom_call.1} parent=95 // pred_check_branch
          %1773 = sbr.rel (%p1771) target = $region100
        $region99: #{tpu_custom_call.1} parent=95 // pred_region
          %s1774 = sand.u32 %s266, 1
          %s1775 = scalar_lea.sflag [#allocation4], %s1774
          %s1776 = sand.u32 %s266, 1
          %s1777 = smul.addr %s1776, 8
          %s1778 = scalar_lea.vmem [#allocation16], %s1777
          %1779 = dma.done %s1775, 128
        $region100: #{tpu_custom_call.1} parent=95 // pred_fallthru
          _
      $region96: #{tpu_custom_call.1} parent=5 // pred_fallthru
        _
    $region6: #{tpu_custom_call.1} parent=1 // loop_footer
      %s36 = sadd.s32 1, %s32
    $region7: #{tpu_custom_call.1} parent=1 // loop_footer_branch
      %31 = sbr.rel target = $region3
    $region8: #{tpu_custom_call.1} parent=1 // loop_exit
      _
    %1780 = vsyncpa [#allocation3], 1
    %s1781 = scalar_lea.sflag [#allocation3], 1
    %1782 = vsyncpa %s1781, 1
    %1783 = vsyncpa [#allocation6], 1
    %s1784 = scalar_lea.sflag [#allocation6], 1
    %1785 = vsyncpa %s1784, 1
    %1786 = vsyncpa [#allocation9], 1
    %s1787 = scalar_lea.sflag [#allocation9], 1
    %1788 = vsyncpa %s1787, 1
    %1789 = vsyncpa [#allocation12], 1
    %s1790 = scalar_lea.sflag [#allocation12], 1
    %1791 = vsyncpa %s1790, 1
    %1792 = vsyncpa [#allocation15], 1
    %s1793 = scalar_lea.sflag [#allocation15], 1
    %1794 = vsyncpa %s1793, 1
    %1795 = vsyncpa [#allocation4], 1
    %s1796 = scalar_lea.sflag [#allocation4], 1
    %1797 = vsyncpa %s1796, 1

</llo_original>
